<compile_context>
chip_gen: v7x
topology: tpu7x:2x2x1
jax: 0.10.0
libtpu: 0.0.40
codegen_flags: <defaults>
</compile_context>

<pallas_src>
import functools

import jax
import jax.numpy as jnp
from jax.experimental import pallas as pl
from jax.experimental.pallas import tpu as pltpu

LN_EPS = 1e-5
FORGET_GATE_BIAS = -1.0


def _layer_norm_1d(x, w, b):
    """torch LayerNorm1D: (x - mean) / (unbiased_std + eps) * w + b, over last dim."""
    n = x.shape[-1]
    mean = jnp.mean(x, axis=-1, keepdims=True)
    var = jnp.sum((x - mean) ** 2, axis=-1, keepdims=True) / (n - 1)
    std = jnp.sqrt(var)
    return (x - mean) / (std + LN_EPS) * w + b


def _meta_opt_kernel(hidden, num_layers,
                     # inputs
                     x_ref, w1_ref, b1_ref, ln1_w_ref, ln1_b_ref,
                     wf_ref, bi2h_ref, bh2h_ref,
                     lni2h_w_ref, lni2h_b_ref, lnh2h_w_ref, lnh2h_b_ref,
                     lnh2o_w_ref, lnh2o_b_ref,
                     w2_ref, b2_ref, state_ref,
                     # outputs
                     y_ref, state_out_ref):
    H = hidden
    L = num_layers

    # ---- linear1 (3 -> H) on the VPU: three broadcast-FMAs (K=3 is too small
    # to be worth an MXU pass, and this avoids padding x on every call). ----
    x = x_ref[...]                        # (tile, 3)
    w1 = w1_ref[...]                      # (3, H)
    h = (x[:, 0:1] * w1[0:1, :]
         + x[:, 1:2] * w1[1:2, :]
         + x[:, 2:3] * w1[2:3, :]
         + b1_ref[...])
    h = jnp.tanh(_layer_norm_1d(h, ln1_w_ref[...], ln1_b_ref[...]))

    # Forget-gate bias as a lane mask over the 4H gate vector (lanes [H, 2H)).
    lane = jax.lax.broadcasted_iota(jnp.int32, (1, 4 * H), 1)
    gate_bias = jnp.where((lane >= H) & (lane < 2 * H),
                          jnp.float32(FORGET_GATE_BIAS), jnp.float32(0.0))

    state = state_ref[...]                # (tile, 2*L*H) packed [hx0|cx0|hx1|cx1|...]
    new_state = []

    # Stacked LayerNormLSTMCell layers (num_layers is static -> unrolled).
    for l in range(L):
        hx = state[:, 2 * l * H:(2 * l + 1) * H]
        cx = state[:, (2 * l + 1) * H:(2 * l + 2) * H]

        # Fused i2h/h2h: [h | hx] @ blockdiag(Wi2h, Wh2h) -> [i2h | h2h]
        hin = jnp.concatenate([h, hx], axis=-1)                       # (tile, 2H)
        gg = jnp.dot(hin, wf_ref[l], preferred_element_type=jnp.float32)  # (tile, 8H)
        i2h = gg[:, :4 * H] + bi2h_ref[l]
        h2h = gg[:, 4 * H:] + bh2h_ref[l]

        g = (_layer_norm_1d(i2h, lni2h_w_ref[l], lni2h_b_ref[l])
             + _layer_norm_1d(h2h, lnh2h_w_ref[l], lnh2h_b_ref[l]))

        # Gate nonlinearities at full 4H lane width: 2 EUP passes instead of 4.
        sig = jax.nn.sigmoid(g + gate_bias)
        tg = jnp.tanh(g)
        in_gate = sig[:, 0:H]
        forget_gate = sig[:, H:2 * H]
        out_gate = sig[:, 2 * H:3 * H]
        in_transform = tg[:, 3 * H:4 * H]

        cx_new = forget_gate * cx + in_gate * in_transform
        hx_new = out_gate * jnp.tanh(
            _layer_norm_1d(cx_new, lnh2o_w_ref[l], lnh2o_b_ref[l]))

        new_state += [hx_new, cx_new]
        h = hx_new

    # One lane-dense (tile, 2*L*H) store for the whole LSTM state.
    state_out_ref[...] = jnp.concatenate(new_state, axis=-1)

    # linear2 (H -> 1): elementwise-mul + lane reduction.
    # TODO(synk): y is 1-lane-wide (masked stores); a feature-major relayout
    # would make it lane-dense too, but y is <1% of the output bytes.
    y_ref[...] = jnp.sum(h * w2_ref[...], axis=-1, keepdims=True) + b2_ref[...]


def init_params(key, hidden, num_layers, dtype=jnp.float32):
    """Deterministic parameter init mirroring torch defaults (+ fused block-diag W)."""
    H = hidden
    ks = jax.random.split(key, 3 + 4 * num_layers)
    k_idx = 0

    def unif(k, shape, bound):
        return jax.random.uniform(k, shape, dtype, minval=-bound, maxval=bound)

    b1_bound = 1.0 / jnp.sqrt(3.0)
    w1 = unif(ks[k_idx], (3, H), b1_bound); k_idx += 1          # linear1 weight^T
    b1 = unif(ks[k_idx], (1, H), b1_bound); k_idx += 1          # linear1 bias
    ln1_w = jnp.ones((1, H), dtype)
    ln1_b = jnp.zeros((1, H), dtype)

    hb = 1.0 / jnp.sqrt(float(H))
    wi2h, bi2h, wh2h, bh2h = [], [], [], []
    for _ in range(num_layers):
        wi2h.append(unif(ks[k_idx], (H, 4 * H), hb)); k_idx += 1
        bi2h.append(unif(ks[k_idx], (1, 4 * H), hb)); k_idx += 1
        wh2h.append(unif(ks[k_idx], (H, 4 * H), hb)); k_idx += 1
        bh2h.append(unif(ks[k_idx], (1, 4 * H), hb)); k_idx += 1
    wi2h_s = jnp.stack(wi2h)            # (L, H, 4H)
    wh2h_s = jnp.stack(wh2h)            # (L, H, 4H)

    # Block-diagonal fused weight, built once: [h | hx] @ W -> [i2h | h2h].
    w_fused = jnp.zeros((num_layers, 2 * H, 8 * H), dtype)
    w_fused = w_fused.at[:, :H, :4 * H].set(wi2h_s)
    w_fused = w_fused.at[:, H:, 4 * H:].set(wh2h_s)

    lni2h_w = jnp.ones((num_layers, 1, 4 * H), dtype)
    lni2h_b = jnp.zeros((num_layers, 1, 4 * H), dtype)
    lnh2h_w = jnp.ones((num_layers, 1, 4 * H), dtype)
    lnh2h_b = jnp.zeros((num_layers, 1, 4 * H), dtype)
    lnh2o_w = jnp.ones((num_layers, 1, H), dtype)
    lnh2o_b = jnp.zeros((num_layers, 1, H), dtype)

    w2 = unif(ks[k_idx], (1, H), hb) * 0.1                      # linear2.weight * 0.1
    b2 = jnp.zeros((1, 1), dtype)                               # linear2.bias = 0

    return dict(
        hidden=H, num_layers=num_layers,
        w1=w1, b1=b1, ln1_w=ln1_w, ln1_b=ln1_b,
        wi2h=wi2h_s, bi2h=jnp.stack(bi2h),
        wh2h=wh2h_s, bh2h=jnp.stack(bh2h),
        w_fused=w_fused,
        lni2h_w=lni2h_w, lni2h_b=lni2h_b,
        lnh2h_w=lnh2h_w, lnh2h_b=lnh2h_b,
        lnh2o_w=lnh2o_w, lnh2o_b=lnh2o_b,
        w2=w2, b2=b2,
    )


def _round_up(x, m):
    return (x + m - 1) // m * m


def pack_state(hx, cx):
    """(L, N, H) hx/cx -> lane-dense (N, 2*L*H) packed as [hx0|cx0|hx1|cx1|...]."""
    L, N, H = hx.shape
    s = jnp.stack([hx, cx], axis=1)              # (L, 2, N, H)
    return jnp.transpose(s, (2, 0, 1, 3)).reshape(N, 2 * L * H)


def unpack_state(state, num_layers, hidden):
    """(N, 2*L*H) packed state -> (hx, cx) each (L, N, H)."""
    N = state.shape[0]
    s = state.reshape(N, num_layers, 2, hidden)
    s = jnp.transpose(s, (1, 2, 0, 3))           # (L, 2, N, H)
    return s[:, 0], s[:, 1]


def meta_optimizer_forward(x, params, state, *, tile_n=2048):
    """Forward pass. Returns (y, new_state) with y shape (N,) and state packed (N, 2*L*H)."""
    N = x.shape[0]
    H = params["hidden"]
    L = params["num_layers"]
    SW = 2 * L * H

    # Row tile: sized for streaming (double-buffered) through scoped VMEM;
    # sweep 512..8192 on real N (v7x: keep within the 64 MiB physical VMEM).
    tile_n = min(tile_n, _round_up(N, 8))
    n_pad = _round_up(N, tile_n)
    x = x.astype(jnp.float32)
    state = state.astype(jnp.float32)
    if n_pad != N:
        x = jnp.pad(x, ((0, n_pad - N), (0, 0)))
        state = jnp.pad(state, ((0, n_pad - N), (0, 0)))

    grid = (n_pad // tile_n,)

    def const_spec(a):
        nd = a.ndim
        return pl.BlockSpec(a.shape, lambda i, _nd=nd: (0,) * _nd)

    def row_spec(shape):
        return pl.BlockSpec(shape, lambda i: (i, 0))

    weight_args = (params["w1"], params["b1"], params["ln1_w"], params["ln1_b"],
                   params["w_fused"], params["bi2h"], params["bh2h"],
                   params["lni2h_w"], params["lni2h_b"],
                   params["lnh2h_w"], params["lnh2h_b"],
                   params["lnh2o_w"], params["lnh2o_b"],
                   params["w2"], params["b2"])

    in_specs = ([row_spec((tile_n, x.shape[1]))]
                + [const_spec(a) for a in weight_args]
                + [row_spec((tile_n, SW))])
    out_specs = (row_spec((tile_n, 1)), row_spec((tile_n, SW)))

    kernel = functools.partial(_meta_opt_kernel, H, L)

    y, state_new = pl.pallas_call(
        kernel,
        out_shape=(
            jax.ShapeDtypeStruct((n_pad, 1), jnp.float32),
            jax.ShapeDtypeStruct((n_pad, SW), jnp.float32),
        ),
        grid_spec=pltpu.PrefetchScalarGridSpec(
            num_scalar_prefetch=0,
            grid=grid,
            in_specs=in_specs,
            out_specs=out_specs,
        ),
        # state (input index 16) is reused in place as output 1 (donatable).
        input_output_aliases={16: 1},
        compiler_params=pltpu.CompilerParams(
            dimension_semantics=("parallel",)),
    )(x, *weight_args, state)

    return y[:N, 0], state_new[:N]


def reference_forward(x, params, hx, cx):
    """Pure-JAX reference (unfused weights) for validation."""
    H = params["hidden"]
    L = params["num_layers"]
    h = x.astype(jnp.float32) @ params["w1"] + params["b1"]
    h = jnp.tanh(_layer_norm_1d(h, params["ln1_w"], params["ln1_b"]))
    hx_out, cx_out = [], []
    for l in range(L):
        i2h = h @ params["wi2h"][l] + params["bi2h"][l]
        h2h = hx[l] @ params["wh2h"][l] + params["bh2h"][l]
        g = (_layer_norm_1d(i2h, params["lni2h_w"][l], params["lni2h_b"][l])
             + _layer_norm_1d(h2h, params["lnh2h_w"][l], params["lnh2h_b"][l]))
        in_g = jax.nn.sigmoid(g[:, 0:H])
        f_g = jax.nn.sigmoid(g[:, H:2 * H] + FORGET_GATE_BIAS)
        o_g = jax.nn.sigmoid(g[:, 2 * H:3 * H])
        it = jnp.tanh(g[:, 3 * H:4 * H])
        c_new = f_g * cx[l] + in_g * it
        h_new = o_g * jnp.tanh(
            _layer_norm_1d(c_new, params["lnh2o_w"][l], params["lnh2o_b"][l]))
        hx_out.append(h_new)
        cx_out.append(c_new)
        h = h_new
    y = jnp.sum(h * params["w2"], axis=-1) + params["b2"][0, 0]
    return y, jnp.stack(hx_out), jnp.stack(cx_out)


if __name__ == "__main__":
    N, H, L = 8, 32, 2               # batch of flat-param rows, hidden_size, num_layers
    key = jax.random.PRNGKey(0)
    k_p, k_x = jax.random.split(key)

    params = init_params(k_p, H, L)
    x = jax.random.normal(k_x, (N, 3), dtype=jnp.float32)
    # reset_lstm: zeros expanded to batch size
    hx0 = jnp.zeros((L, N, H), jnp.float32)
    cx0 = jnp.zeros((L, N, H), jnp.float32)
    state0 = pack_state(hx0, cx0)    # lane-dense (N, 2*L*H)

    y, state_new = meta_optimizer_forward(x, params, state0)
    y = jax.block_until_ready(y)

    y_ref, hx_ref, cx_ref = reference_forward(x, params, hx0, cx0)
    hx_new, cx_new = unpack_state(state_new, L, H)

    assert y.shape == (N,)
    assert jnp.allclose(y, y_ref, atol=3e-5), "output mismatch vs reference"
    assert jnp.allclose(hx_new, hx_ref, atol=3e-5), "hx mismatch vs reference"
    assert jnp.allclose(cx_new, cx_ref, atol=3e-5), "cx mismatch vs reference"

    print("KERNEL_OK")
</pallas_src>

<mosaic_0001>
module attributes {stable_mosaic.version = 11 : i64} {
  func.func @_meta_opt_kernel(%arg0: i32, %arg1: memref<8x3xf32, #tpu.memory_space<vmem>>, %arg2: memref<3x32xf32, #tpu.memory_space<vmem>>, %arg3: memref<1x32xf32, #tpu.memory_space<vmem>>, %arg4: memref<1x32xf32, #tpu.memory_space<vmem>>, %arg5: memref<1x32xf32, #tpu.memory_space<vmem>>, %arg6: memref<2x64x256xf32, #tpu.memory_space<vmem>>, %arg7: memref<2x1x128xf32, #tpu.memory_space<vmem>>, %arg8: memref<2x1x128xf32, #tpu.memory_space<vmem>>, %arg9: memref<2x1x128xf32, #tpu.memory_space<vmem>>, %arg10: memref<2x1x128xf32, #tpu.memory_space<vmem>>, %arg11: memref<2x1x128xf32, #tpu.memory_space<vmem>>, %arg12: memref<2x1x128xf32, #tpu.memory_space<vmem>>, %arg13: memref<2x1x32xf32, #tpu.memory_space<vmem>>, %arg14: memref<2x1x32xf32, #tpu.memory_space<vmem>>, %arg15: memref<1x32xf32, #tpu.memory_space<vmem>>, %arg16: memref<1x1xf32, #tpu.memory_space<vmem>>, %arg17: memref<8x128xf32, #tpu.memory_space<vmem>>, %arg18: memref<8x1xf32, #tpu.memory_space<vmem>>, %arg19: memref<8x128xf32, #tpu.memory_space<vmem>>) attributes {dimension_semantics = [#tpu.dimension_semantics<parallel>], iteration_bounds = array<i64: 1>, scalar_prefetch = 0 : i64, scratch_operands = 0 : i64, tpu.core_type = #tpu.core_type<tc>, window_params = [{transform_indices = @transform_0, window_bounds = array<i64: 8, 3>}, {pipeline_mode = #tpu.pipeline_mode<synchronous>, transform_indices = @transform_1, window_bounds = array<i64: 3, 32>}, {pipeline_mode = #tpu.pipeline_mode<synchronous>, transform_indices = @transform_2, window_bounds = array<i64: 1, 32>}, {pipeline_mode = #tpu.pipeline_mode<synchronous>, transform_indices = @transform_3, window_bounds = array<i64: 1, 32>}, {pipeline_mode = #tpu.pipeline_mode<synchronous>, transform_indices = @transform_4, window_bounds = array<i64: 1, 32>}, {pipeline_mode = #tpu.pipeline_mode<synchronous>, transform_indices = @transform_5, window_bounds = array<i64: 2, 64, 256>}, {pipeline_mode = #tpu.pipeline_mode<synchronous>, transform_indices = @transform_6, window_bounds = array<i64: 2, 1, 128>}, {pipeline_mode = #tpu.pipeline_mode<synchronous>, transform_indices = @transform_7, window_bounds = array<i64: 2, 1, 128>}, {pipeline_mode = #tpu.pipeline_mode<synchronous>, transform_indices = @transform_8, window_bounds = array<i64: 2, 1, 128>}, {pipeline_mode = #tpu.pipeline_mode<synchronous>, transform_indices = @transform_9, window_bounds = array<i64: 2, 1, 128>}, {pipeline_mode = #tpu.pipeline_mode<synchronous>, transform_indices = @transform_10, window_bounds = array<i64: 2, 1, 128>}, {pipeline_mode = #tpu.pipeline_mode<synchronous>, transform_indices = @transform_11, window_bounds = array<i64: 2, 1, 128>}, {pipeline_mode = #tpu.pipeline_mode<synchronous>, transform_indices = @transform_12, window_bounds = array<i64: 2, 1, 32>}, {pipeline_mode = #tpu.pipeline_mode<synchronous>, transform_indices = @transform_13, window_bounds = array<i64: 2, 1, 32>}, {pipeline_mode = #tpu.pipeline_mode<synchronous>, transform_indices = @transform_14, window_bounds = array<i64: 1, 32>}, {pipeline_mode = #tpu.pipeline_mode<synchronous>, transform_indices = @transform_15, window_bounds = array<i64: 1, 1>}, {transform_indices = @transform_16, window_bounds = array<i64: 8, 128>}, {transform_indices = @transform_17, window_bounds = array<i64: 8, 1>}, {transform_indices = @transform_18, window_bounds = array<i64: 8, 128>}]} {
    %c0 = arith.constant 0 : index
    %c0_0 = arith.constant 0 : index
    %0 = vector.load %arg1[%c0, %c0_0] : memref<8x3xf32, #tpu.memory_space<vmem>>, vector<8x3xf32>
    %c0_1 = arith.constant 0 : index
    %c0_2 = arith.constant 0 : index
    %1 = vector.load %arg2[%c0_1, %c0_2] : memref<3x32xf32, #tpu.memory_space<vmem>>, vector<3x32xf32>
    %2 = vector.extract_strided_slice %0 {offsets = [0, 0], sizes = [8, 1], strides = [1, 1]} : vector<8x3xf32> to vector<8x1xf32>
    %3 = vector.extract_strided_slice %1 {offsets = [0, 0], sizes = [1, 32], strides = [1, 1]} : vector<3x32xf32> to vector<1x32xf32>
    %4 = vector.broadcast %2 : vector<8x1xf32> to vector<8x32xf32>
    %5 = vector.broadcast %3 : vector<1x32xf32> to vector<8x32xf32>
    %6 = arith.mulf %4, %5 : vector<8x32xf32>
    %7 = vector.extract_strided_slice %0 {offsets = [0, 1], sizes = [8, 1], strides = [1, 1]} : vector<8x3xf32> to vector<8x1xf32>
    %8 = vector.extract_strided_slice %1 {offsets = [1, 0], sizes = [1, 32], strides = [1, 1]} : vector<3x32xf32> to vector<1x32xf32>
    %9 = vector.broadcast %7 : vector<8x1xf32> to vector<8x32xf32>
    %10 = vector.broadcast %8 : vector<1x32xf32> to vector<8x32xf32>
    %11 = arith.mulf %9, %10 : vector<8x32xf32>
    %12 = arith.addf %6, %11 : vector<8x32xf32>
    %13 = vector.extract_strided_slice %0 {offsets = [0, 2], sizes = [8, 1], strides = [1, 1]} : vector<8x3xf32> to vector<8x1xf32>
    %14 = vector.extract_strided_slice %1 {offsets = [2, 0], sizes = [1, 32], strides = [1, 1]} : vector<3x32xf32> to vector<1x32xf32>
    %15 = vector.broadcast %13 : vector<8x1xf32> to vector<8x32xf32>
    %16 = vector.broadcast %14 : vector<1x32xf32> to vector<8x32xf32>
    %17 = arith.mulf %15, %16 : vector<8x32xf32>
    %18 = arith.addf %12, %17 : vector<8x32xf32>
    %c0_3 = arith.constant 0 : index
    %c0_4 = arith.constant 0 : index
    %19 = vector.load %arg3[%c0_3, %c0_4] : memref<1x32xf32, #tpu.memory_space<vmem>>, vector<1x32xf32>
    %20 = vector.broadcast %19 : vector<1x32xf32> to vector<8x32xf32>
    %21 = arith.addf %18, %20 : vector<8x32xf32>
    %c0_5 = arith.constant 0 : index
    %c0_6 = arith.constant 0 : index
    %22 = vector.load %arg4[%c0_5, %c0_6] : memref<1x32xf32, #tpu.memory_space<vmem>>, vector<1x32xf32>
    %c0_7 = arith.constant 0 : index
    %c0_8 = arith.constant 0 : index
    %23 = vector.load %arg5[%c0_7, %c0_8] : memref<1x32xf32, #tpu.memory_space<vmem>>, vector<1x32xf32>
    %cst = arith.constant dense<0.000000e+00> : vector<8xf32>
    %24 = vector.multi_reduction <add>, %21, %cst [1] : vector<8x32xf32> to vector<8xf32>
    %25 = vector.shape_cast %24 : vector<8xf32> to vector<8x1xf32>
    %cst_9 = arith.constant 3.200000e+01 : f32
    %26 = vector.broadcast %cst_9 : f32 to vector<8x1xf32>
    %27 = arith.divf %25, %26 : vector<8x1xf32>
    %28 = vector.broadcast %27 : vector<8x1xf32> to vector<8x32xf32>
    %29 = arith.subf %21, %28 : vector<8x32xf32>
    %30 = arith.mulf %29, %29 : vector<8x32xf32>
    %cst_10 = arith.constant dense<0.000000e+00> : vector<8xf32>
    %31 = vector.multi_reduction <add>, %30, %cst_10 [1] : vector<8x32xf32> to vector<8xf32>
    %32 = vector.shape_cast %31 : vector<8xf32> to vector<8x1xf32>
    %cst_11 = arith.constant 3.100000e+01 : f32
    %33 = vector.broadcast %cst_11 : f32 to vector<8x1xf32>
    %34 = arith.divf %32, %33 : vector<8x1xf32>
    %35 = math.sqrt %34 : vector<8x1xf32>
    %36 = vector.broadcast %27 : vector<8x1xf32> to vector<8x32xf32>
    %37 = arith.subf %21, %36 : vector<8x32xf32>
    %cst_12 = arith.constant 9.99999974E-6 : f32
    %38 = vector.broadcast %cst_12 : f32 to vector<8x1xf32>
    %39 = arith.addf %35, %38 : vector<8x1xf32>
    %40 = vector.broadcast %39 : vector<8x1xf32> to vector<8x32xf32>
    %41 = arith.divf %37, %40 : vector<8x32xf32>
    %42 = vector.broadcast %22 : vector<1x32xf32> to vector<8x32xf32>
    %43 = arith.mulf %41, %42 : vector<8x32xf32>
    %44 = vector.broadcast %23 : vector<1x32xf32> to vector<8x32xf32>
    %45 = arith.addf %43, %44 : vector<8x32xf32>
    %46 = math.tanh %45 : vector<8x32xf32>
    %47 = tpu.iota {dimensions = array<i32: 1>} : vector<1x128xi32>
    %c32_i32 = arith.constant 32 : i32
    %48 = vector.broadcast %c32_i32 : i32 to vector<1x128xi32>
    %49 = arith.cmpi sge, %47, %48 : vector<1x128xi32>
    %c64_i32 = arith.constant 64 : i32
    %50 = vector.broadcast %c64_i32 : i32 to vector<1x128xi32>
    %51 = arith.cmpi slt, %47, %50 : vector<1x128xi32>
    %52 = arith.andi %49, %51 : vector<1x128xi1>
    %cst_13 = arith.constant -1.000000e+00 : f32
    %cst_14 = arith.constant 0.000000e+00 : f32
    %53 = vector.broadcast %cst_13 : f32 to vector<1x128xf32>
    %54 = vector.broadcast %cst_14 : f32 to vector<1x128xf32>
    %55 = arith.select %52, %53, %54 : vector<1x128xi1>, vector<1x128xf32>
    %c0_15 = arith.constant 0 : index
    %c0_16 = arith.constant 0 : index
    %56 = vector.load %arg17[%c0_15, %c0_16] : memref<8x128xf32, #tpu.memory_space<vmem>>, vector<8x128xf32>
    %57 = vector.extract_strided_slice %56 {offsets = [0, 0], sizes = [8, 32], strides = [1, 1]} : vector<8x128xf32> to vector<8x32xf32>
    %58 = vector.extract_strided_slice %56 {offsets = [0, 32], sizes = [8, 32], strides = [1, 1]} : vector<8x128xf32> to vector<8x32xf32>
    %59 = tpu.concatenate %46, %57 in 1 : vector<8x32xf32>, vector<8x32xf32> -> vector<8x64xf32>
    %c0_17 = arith.constant 0 : index
    %c0_18 = arith.constant 0 : index
    %c0_19 = arith.constant 0 : index
    %60 = vector.load %arg6[%c0_17, %c0_18, %c0_19] : memref<2x64x256xf32, #tpu.memory_space<vmem>>, vector<1x64x256xf32>
    %61 = vector.shape_cast %60 : vector<1x64x256xf32> to vector<64x256xf32>
    %cst_20 = arith.constant dense<0.000000e+00> : vector<8x256xf32>
    %62 = tpu.matmul %59, %61, %cst_20 {dimension_numbers = #tpu.dot_dimension_numbers<[1], [0], [0], [1], [0, 0, 1, 1], [], []>} : vector<8x64xf32>, vector<64x256xf32>, vector<8x256xf32> -> vector<8x256xf32>
    %63 = vector.extract_strided_slice %62 {offsets = [0, 0], sizes = [8, 128], strides = [1, 1]} : vector<8x256xf32> to vector<8x128xf32>
    %c0_21 = arith.constant 0 : index
    %c0_22 = arith.constant 0 : index
    %c0_23 = arith.constant 0 : index
    %64 = vector.load %arg7[%c0_21, %c0_22, %c0_23] : memref<2x1x128xf32, #tpu.memory_space<vmem>>, vector<1x1x128xf32>
    %65 = vector.shape_cast %64 : vector<1x1x128xf32> to vector<1x128xf32>
    %66 = vector.broadcast %65 : vector<1x128xf32> to vector<8x128xf32>
    %67 = arith.addf %63, %66 : vector<8x128xf32>
    %68 = vector.extract_strided_slice %62 {offsets = [0, 128], sizes = [8, 128], strides = [1, 1]} : vector<8x256xf32> to vector<8x128xf32>
    %c0_24 = arith.constant 0 : index
    %c0_25 = arith.constant 0 : index
    %c0_26 = arith.constant 0 : index
    %69 = vector.load %arg8[%c0_24, %c0_25, %c0_26] : memref<2x1x128xf32, #tpu.memory_space<vmem>>, vector<1x1x128xf32>
    %70 = vector.shape_cast %69 : vector<1x1x128xf32> to vector<1x128xf32>
    %71 = vector.broadcast %70 : vector<1x128xf32> to vector<8x128xf32>
    %72 = arith.addf %68, %71 : vector<8x128xf32>
    %c0_27 = arith.constant 0 : index
    %c0_28 = arith.constant 0 : index
    %c0_29 = arith.constant 0 : index
    %73 = vector.load %arg9[%c0_27, %c0_28, %c0_29] : memref<2x1x128xf32, #tpu.memory_space<vmem>>, vector<1x1x128xf32>
    %74 = vector.shape_cast %73 : vector<1x1x128xf32> to vector<1x128xf32>
    %c0_30 = arith.constant 0 : index
    %c0_31 = arith.constant 0 : index
    %c0_32 = arith.constant 0 : index
    %75 = vector.load %arg10[%c0_30, %c0_31, %c0_32] : memref<2x1x128xf32, #tpu.memory_space<vmem>>, vector<1x1x128xf32>
    %76 = vector.shape_cast %75 : vector<1x1x128xf32> to vector<1x128xf32>
    %cst_33 = arith.constant dense<0.000000e+00> : vector<8xf32>
    %77 = vector.multi_reduction <add>, %67, %cst_33 [1] : vector<8x128xf32> to vector<8xf32>
    %78 = vector.shape_cast %77 : vector<8xf32> to vector<8x1xf32>
    %cst_34 = arith.constant 1.280000e+02 : f32
    %79 = vector.broadcast %cst_34 : f32 to vector<8x1xf32>
    %80 = arith.divf %78, %79 : vector<8x1xf32>
    %81 = vector.broadcast %80 : vector<8x1xf32> to vector<8x128xf32>
    %82 = arith.subf %67, %81 : vector<8x128xf32>
    %83 = arith.mulf %82, %82 : vector<8x128xf32>
    %cst_35 = arith.constant dense<0.000000e+00> : vector<8xf32>
    %84 = vector.multi_reduction <add>, %83, %cst_35 [1] : vector<8x128xf32> to vector<8xf32>
    %85 = vector.shape_cast %84 : vector<8xf32> to vector<8x1xf32>
    %cst_36 = arith.constant 1.270000e+02 : f32
    %86 = vector.broadcast %cst_36 : f32 to vector<8x1xf32>
    %87 = arith.divf %85, %86 : vector<8x1xf32>
    %88 = math.sqrt %87 : vector<8x1xf32>
    %89 = vector.broadcast %80 : vector<8x1xf32> to vector<8x128xf32>
    %90 = arith.subf %67, %89 : vector<8x128xf32>
    %cst_37 = arith.constant 9.99999974E-6 : f32
    %91 = vector.broadcast %cst_37 : f32 to vector<8x1xf32>
    %92 = arith.addf %88, %91 : vector<8x1xf32>
    %93 = vector.broadcast %92 : vector<8x1xf32> to vector<8x128xf32>
    %94 = arith.divf %90, %93 : vector<8x128xf32>
    %95 = vector.broadcast %74 : vector<1x128xf32> to vector<8x128xf32>
    %96 = arith.mulf %94, %95 : vector<8x128xf32>
    %97 = vector.broadcast %76 : vector<1x128xf32> to vector<8x128xf32>
    %98 = arith.addf %96, %97 : vector<8x128xf32>
    %c0_38 = arith.constant 0 : index
    %c0_39 = arith.constant 0 : index
    %c0_40 = arith.constant 0 : index
    %99 = vector.load %arg11[%c0_38, %c0_39, %c0_40] : memref<2x1x128xf32, #tpu.memory_space<vmem>>, vector<1x1x128xf32>
    %100 = vector.shape_cast %99 : vector<1x1x128xf32> to vector<1x128xf32>
    %c0_41 = arith.constant 0 : index
    %c0_42 = arith.constant 0 : index
    %c0_43 = arith.constant 0 : index
    %101 = vector.load %arg12[%c0_41, %c0_42, %c0_43] : memref<2x1x128xf32, #tpu.memory_space<vmem>>, vector<1x1x128xf32>
    %102 = vector.shape_cast %101 : vector<1x1x128xf32> to vector<1x128xf32>
    %cst_44 = arith.constant dense<0.000000e+00> : vector<8xf32>
    %103 = vector.multi_reduction <add>, %72, %cst_44 [1] : vector<8x128xf32> to vector<8xf32>
    %104 = vector.shape_cast %103 : vector<8xf32> to vector<8x1xf32>
    %cst_45 = arith.constant 1.280000e+02 : f32
    %105 = vector.broadcast %cst_45 : f32 to vector<8x1xf32>
    %106 = arith.divf %104, %105 : vector<8x1xf32>
    %107 = vector.broadcast %106 : vector<8x1xf32> to vector<8x128xf32>
    %108 = arith.subf %72, %107 : vector<8x128xf32>
    %109 = arith.mulf %108, %108 : vector<8x128xf32>
    %cst_46 = arith.constant dense<0.000000e+00> : vector<8xf32>
    %110 = vector.multi_reduction <add>, %109, %cst_46 [1] : vector<8x128xf32> to vector<8xf32>
    %111 = vector.shape_cast %110 : vector<8xf32> to vector<8x1xf32>
    %cst_47 = arith.constant 1.270000e+02 : f32
    %112 = vector.broadcast %cst_47 : f32 to vector<8x1xf32>
    %113 = arith.divf %111, %112 : vector<8x1xf32>
    %114 = math.sqrt %113 : vector<8x1xf32>
    %115 = vector.broadcast %106 : vector<8x1xf32> to vector<8x128xf32>
    %116 = arith.subf %72, %115 : vector<8x128xf32>
    %cst_48 = arith.constant 9.99999974E-6 : f32
    %117 = vector.broadcast %cst_48 : f32 to vector<8x1xf32>
    %118 = arith.addf %114, %117 : vector<8x1xf32>
    %119 = vector.broadcast %118 : vector<8x1xf32> to vector<8x128xf32>
    %120 = arith.divf %116, %119 : vector<8x128xf32>
    %121 = vector.broadcast %100 : vector<1x128xf32> to vector<8x128xf32>
    %122 = arith.mulf %120, %121 : vector<8x128xf32>
    %123 = vector.broadcast %102 : vector<1x128xf32> to vector<8x128xf32>
    %124 = arith.addf %122, %123 : vector<8x128xf32>
    %125 = arith.addf %98, %124 : vector<8x128xf32>
    %126 = vector.broadcast %55 : vector<1x128xf32> to vector<8x128xf32>
    %127 = arith.addf %125, %126 : vector<8x128xf32>
    %128 = arith.negf %127 : vector<8x128xf32>
    %129 = math.exp %128 : vector<8x128xf32>
    %cst_49 = arith.constant 1.000000e+00 : f32
    %130 = vector.broadcast %cst_49 : f32 to vector<8x128xf32>
    %131 = arith.addf %130, %129 : vector<8x128xf32>
    %132 = arith.divf %130, %131 : vector<8x128xf32>
    %133 = math.tanh %125 : vector<8x128xf32>
    %134 = vector.extract_strided_slice %132 {offsets = [0, 0], sizes = [8, 32], strides = [1, 1]} : vector<8x128xf32> to vector<8x32xf32>
    %135 = vector.extract_strided_slice %132 {offsets = [0, 32], sizes = [8, 32], strides = [1, 1]} : vector<8x128xf32> to vector<8x32xf32>
    %136 = vector.extract_strided_slice %132 {offsets = [0, 64], sizes = [8, 32], strides = [1, 1]} : vector<8x128xf32> to vector<8x32xf32>
    %137 = vector.extract_strided_slice %133 {offsets = [0, 96], sizes = [8, 32], strides = [1, 1]} : vector<8x128xf32> to vector<8x32xf32>
    %138 = arith.mulf %135, %58 : vector<8x32xf32>
    %139 = arith.mulf %134, %137 : vector<8x32xf32>
    %140 = arith.addf %138, %139 : vector<8x32xf32>
    %c0_50 = arith.constant 0 : index
    %c0_51 = arith.constant 0 : index
    %c0_52 = arith.constant 0 : index
    %141 = vector.load %arg13[%c0_50, %c0_51, %c0_52] : memref<2x1x32xf32, #tpu.memory_space<vmem>>, vector<1x1x32xf32>
    %142 = vector.shape_cast %141 : vector<1x1x32xf32> to vector<1x32xf32>
    %c0_53 = arith.constant 0 : index
    %c0_54 = arith.constant 0 : index
    %c0_55 = arith.constant 0 : index
    %143 = vector.load %arg14[%c0_53, %c0_54, %c0_55] : memref<2x1x32xf32, #tpu.memory_space<vmem>>, vector<1x1x32xf32>
    %144 = vector.shape_cast %143 : vector<1x1x32xf32> to vector<1x32xf32>
    %cst_56 = arith.constant dense<0.000000e+00> : vector<8xf32>
    %145 = vector.multi_reduction <add>, %140, %cst_56 [1] : vector<8x32xf32> to vector<8xf32>
    %146 = vector.shape_cast %145 : vector<8xf32> to vector<8x1xf32>
    %cst_57 = arith.constant 3.200000e+01 : f32
    %147 = vector.broadcast %cst_57 : f32 to vector<8x1xf32>
    %148 = arith.divf %146, %147 : vector<8x1xf32>
    %149 = vector.broadcast %148 : vector<8x1xf32> to vector<8x32xf32>
    %150 = arith.subf %140, %149 : vector<8x32xf32>
    %151 = arith.mulf %150, %150 : vector<8x32xf32>
    %cst_58 = arith.constant dense<0.000000e+00> : vector<8xf32>
    %152 = vector.multi_reduction <add>, %151, %cst_58 [1] : vector<8x32xf32> to vector<8xf32>
    %153 = vector.shape_cast %152 : vector<8xf32> to vector<8x1xf32>
    %cst_59 = arith.constant 3.100000e+01 : f32
    %154 = vector.broadcast %cst_59 : f32 to vector<8x1xf32>
    %155 = arith.divf %153, %154 : vector<8x1xf32>
    %156 = math.sqrt %155 : vector<8x1xf32>
    %157 = vector.broadcast %148 : vector<8x1xf32> to vector<8x32xf32>
    %158 = arith.subf %140, %157 : vector<8x32xf32>
    %cst_60 = arith.constant 9.99999974E-6 : f32
    %159 = vector.broadcast %cst_60 : f32 to vector<8x1xf32>
    %160 = arith.addf %156, %159 : vector<8x1xf32>
    %161 = vector.broadcast %160 : vector<8x1xf32> to vector<8x32xf32>
    %162 = arith.divf %158, %161 : vector<8x32xf32>
    %163 = vector.broadcast %142 : vector<1x32xf32> to vector<8x32xf32>
    %164 = arith.mulf %162, %163 : vector<8x32xf32>
    %165 = vector.broadcast %144 : vector<1x32xf32> to vector<8x32xf32>
    %166 = arith.addf %164, %165 : vector<8x32xf32>
    %167 = math.tanh %166 : vector<8x32xf32>
    %168 = arith.mulf %136, %167 : vector<8x32xf32>
    %169 = vector.extract_strided_slice %56 {offsets = [0, 64], sizes = [8, 32], strides = [1, 1]} : vector<8x128xf32> to vector<8x32xf32>
    %170 = vector.extract_strided_slice %56 {offsets = [0, 96], sizes = [8, 32], strides = [1, 1]} : vector<8x128xf32> to vector<8x32xf32>
    %171 = tpu.concatenate %168, %169 in 1 : vector<8x32xf32>, vector<8x32xf32> -> vector<8x64xf32>
    %c1 = arith.constant 1 : index
    %c0_61 = arith.constant 0 : index
    %c0_62 = arith.constant 0 : index
    %172 = vector.load %arg6[%c1, %c0_61, %c0_62] : memref<2x64x256xf32, #tpu.memory_space<vmem>>, vector<1x64x256xf32>
    %173 = vector.shape_cast %172 : vector<1x64x256xf32> to vector<64x256xf32>
    %cst_63 = arith.constant dense<0.000000e+00> : vector<8x256xf32>
    %174 = tpu.matmul %171, %173, %cst_63 {dimension_numbers = #tpu.dot_dimension_numbers<[1], [0], [0], [1], [0, 0, 1, 1], [], []>} : vector<8x64xf32>, vector<64x256xf32>, vector<8x256xf32> -> vector<8x256xf32>
    %175 = vector.extract_strided_slice %174 {offsets = [0, 0], sizes = [8, 128], strides = [1, 1]} : vector<8x256xf32> to vector<8x128xf32>
    %c1_64 = arith.constant 1 : index
    %c0_65 = arith.constant 0 : index
    %c0_66 = arith.constant 0 : index
    %176 = vector.load %arg7[%c1_64, %c0_65, %c0_66] : memref<2x1x128xf32, #tpu.memory_space<vmem>>, vector<1x1x128xf32>
    %177 = vector.shape_cast %176 : vector<1x1x128xf32> to vector<1x128xf32>
    %178 = vector.broadcast %177 : vector<1x128xf32> to vector<8x128xf32>
    %179 = arith.addf %175, %178 : vector<8x128xf32>
    %180 = vector.extract_strided_slice %174 {offsets = [0, 128], sizes = [8, 128], strides = [1, 1]} : vector<8x256xf32> to vector<8x128xf32>
    %c1_67 = arith.constant 1 : index
    %c0_68 = arith.constant 0 : index
    %c0_69 = arith.constant 0 : index
    %181 = vector.load %arg8[%c1_67, %c0_68, %c0_69] : memref<2x1x128xf32, #tpu.memory_space<vmem>>, vector<1x1x128xf32>
    %182 = vector.shape_cast %181 : vector<1x1x128xf32> to vector<1x128xf32>
    %183 = vector.broadcast %182 : vector<1x128xf32> to vector<8x128xf32>
    %184 = arith.addf %180, %183 : vector<8x128xf32>
    %c1_70 = arith.constant 1 : index
    %c0_71 = arith.constant 0 : index
    %c0_72 = arith.constant 0 : index
    %185 = vector.load %arg9[%c1_70, %c0_71, %c0_72] : memref<2x1x128xf32, #tpu.memory_space<vmem>>, vector<1x1x128xf32>
    %186 = vector.shape_cast %185 : vector<1x1x128xf32> to vector<1x128xf32>
    %c1_73 = arith.constant 1 : index
    %c0_74 = arith.constant 0 : index
    %c0_75 = arith.constant 0 : index
    %187 = vector.load %arg10[%c1_73, %c0_74, %c0_75] : memref<2x1x128xf32, #tpu.memory_space<vmem>>, vector<1x1x128xf32>
    %188 = vector.shape_cast %187 : vector<1x1x128xf32> to vector<1x128xf32>
    %cst_76 = arith.constant dense<0.000000e+00> : vector<8xf32>
    %189 = vector.multi_reduction <add>, %179, %cst_76 [1] : vector<8x128xf32> to vector<8xf32>
    %190 = vector.shape_cast %189 : vector<8xf32> to vector<8x1xf32>
    %cst_77 = arith.constant 1.280000e+02 : f32
    %191 = vector.broadcast %cst_77 : f32 to vector<8x1xf32>
    %192 = arith.divf %190, %191 : vector<8x1xf32>
    %193 = vector.broadcast %192 : vector<8x1xf32> to vector<8x128xf32>
    %194 = arith.subf %179, %193 : vector<8x128xf32>
    %195 = arith.mulf %194, %194 : vector<8x128xf32>
    %cst_78 = arith.constant dense<0.000000e+00> : vector<8xf32>
    %196 = vector.multi_reduction <add>, %195, %cst_78 [1] : vector<8x128xf32> to vector<8xf32>
    %197 = vector.shape_cast %196 : vector<8xf32> to vector<8x1xf32>
    %cst_79 = arith.constant 1.270000e+02 : f32
    %198 = vector.broadcast %cst_79 : f32 to vector<8x1xf32>
    %199 = arith.divf %197, %198 : vector<8x1xf32>
    %200 = math.sqrt %199 : vector<8x1xf32>
    %201 = vector.broadcast %192 : vector<8x1xf32> to vector<8x128xf32>
    %202 = arith.subf %179, %201 : vector<8x128xf32>
    %cst_80 = arith.constant 9.99999974E-6 : f32
    %203 = vector.broadcast %cst_80 : f32 to vector<8x1xf32>
    %204 = arith.addf %200, %203 : vector<8x1xf32>
    %205 = vector.broadcast %204 : vector<8x1xf32> to vector<8x128xf32>
    %206 = arith.divf %202, %205 : vector<8x128xf32>
    %207 = vector.broadcast %186 : vector<1x128xf32> to vector<8x128xf32>
    %208 = arith.mulf %206, %207 : vector<8x128xf32>
    %209 = vector.broadcast %188 : vector<1x128xf32> to vector<8x128xf32>
    %210 = arith.addf %208, %209 : vector<8x128xf32>
    %c1_81 = arith.constant 1 : index
    %c0_82 = arith.constant 0 : index
    %c0_83 = arith.constant 0 : index
    %211 = vector.load %arg11[%c1_81, %c0_82, %c0_83] : memref<2x1x128xf32, #tpu.memory_space<vmem>>, vector<1x1x128xf32>
    %212 = vector.shape_cast %211 : vector<1x1x128xf32> to vector<1x128xf32>
    %c1_84 = arith.constant 1 : index
    %c0_85 = arith.constant 0 : index
    %c0_86 = arith.constant 0 : index
    %213 = vector.load %arg12[%c1_84, %c0_85, %c0_86] : memref<2x1x128xf32, #tpu.memory_space<vmem>>, vector<1x1x128xf32>
    %214 = vector.shape_cast %213 : vector<1x1x128xf32> to vector<1x128xf32>
    %cst_87 = arith.constant dense<0.000000e+00> : vector<8xf32>
    %215 = vector.multi_reduction <add>, %184, %cst_87 [1] : vector<8x128xf32> to vector<8xf32>
    %216 = vector.shape_cast %215 : vector<8xf32> to vector<8x1xf32>
    %cst_88 = arith.constant 1.280000e+02 : f32
    %217 = vector.broadcast %cst_88 : f32 to vector<8x1xf32>
    %218 = arith.divf %216, %217 : vector<8x1xf32>
    %219 = vector.broadcast %218 : vector<8x1xf32> to vector<8x128xf32>
    %220 = arith.subf %184, %219 : vector<8x128xf32>
    %221 = arith.mulf %220, %220 : vector<8x128xf32>
    %cst_89 = arith.constant dense<0.000000e+00> : vector<8xf32>
    %222 = vector.multi_reduction <add>, %221, %cst_89 [1] : vector<8x128xf32> to vector<8xf32>
    %223 = vector.shape_cast %222 : vector<8xf32> to vector<8x1xf32>
    %cst_90 = arith.constant 1.270000e+02 : f32
    %224 = vector.broadcast %cst_90 : f32 to vector<8x1xf32>
    %225 = arith.divf %223, %224 : vector<8x1xf32>
    %226 = math.sqrt %225 : vector<8x1xf32>
    %227 = vector.broadcast %218 : vector<8x1xf32> to vector<8x128xf32>
    %228 = arith.subf %184, %227 : vector<8x128xf32>
    %cst_91 = arith.constant 9.99999974E-6 : f32
    %229 = vector.broadcast %cst_91 : f32 to vector<8x1xf32>
    %230 = arith.addf %226, %229 : vector<8x1xf32>
    %231 = vector.broadcast %230 : vector<8x1xf32> to vector<8x128xf32>
    %232 = arith.divf %228, %231 : vector<8x128xf32>
    %233 = vector.broadcast %212 : vector<1x128xf32> to vector<8x128xf32>
    %234 = arith.mulf %232, %233 : vector<8x128xf32>
    %235 = vector.broadcast %214 : vector<1x128xf32> to vector<8x128xf32>
    %236 = arith.addf %234, %235 : vector<8x128xf32>
    %237 = arith.addf %210, %236 : vector<8x128xf32>
    %238 = vector.broadcast %55 : vector<1x128xf32> to vector<8x128xf32>
    %239 = arith.addf %237, %238 : vector<8x128xf32>
    %240 = arith.negf %239 : vector<8x128xf32>
    %241 = math.exp %240 : vector<8x128xf32>
    %cst_92 = arith.constant 1.000000e+00 : f32
    %242 = vector.broadcast %cst_92 : f32 to vector<8x128xf32>
    %243 = arith.addf %242, %241 : vector<8x128xf32>
    %244 = arith.divf %242, %243 : vector<8x128xf32>
    %245 = math.tanh %237 : vector<8x128xf32>
    %246 = vector.extract_strided_slice %244 {offsets = [0, 0], sizes = [8, 32], strides = [1, 1]} : vector<8x128xf32> to vector<8x32xf32>
    %247 = vector.extract_strided_slice %244 {offsets = [0, 32], sizes = [8, 32], strides = [1, 1]} : vector<8x128xf32> to vector<8x32xf32>
    %248 = vector.extract_strided_slice %244 {offsets = [0, 64], sizes = [8, 32], strides = [1, 1]} : vector<8x128xf32> to vector<8x32xf32>
    %249 = vector.extract_strided_slice %245 {offsets = [0, 96], sizes = [8, 32], strides = [1, 1]} : vector<8x128xf32> to vector<8x32xf32>
    %250 = arith.mulf %247, %170 : vector<8x32xf32>
    %251 = arith.mulf %246, %249 : vector<8x32xf32>
    %252 = arith.addf %250, %251 : vector<8x32xf32>
    %c1_93 = arith.constant 1 : index
    %c0_94 = arith.constant 0 : index
    %c0_95 = arith.constant 0 : index
    %253 = vector.load %arg13[%c1_93, %c0_94, %c0_95] : memref<2x1x32xf32, #tpu.memory_space<vmem>>, vector<1x1x32xf32>
    %254 = vector.shape_cast %253 : vector<1x1x32xf32> to vector<1x32xf32>
    %c1_96 = arith.constant 1 : index
    %c0_97 = arith.constant 0 : index
    %c0_98 = arith.constant 0 : index
    %255 = vector.load %arg14[%c1_96, %c0_97, %c0_98] : memref<2x1x32xf32, #tpu.memory_space<vmem>>, vector<1x1x32xf32>
    %256 = vector.shape_cast %255 : vector<1x1x32xf32> to vector<1x32xf32>
    %cst_99 = arith.constant dense<0.000000e+00> : vector<8xf32>
    %257 = vector.multi_reduction <add>, %252, %cst_99 [1] : vector<8x32xf32> to vector<8xf32>
    %258 = vector.shape_cast %257 : vector<8xf32> to vector<8x1xf32>
    %cst_100 = arith.constant 3.200000e+01 : f32
    %259 = vector.broadcast %cst_100 : f32 to vector<8x1xf32>
    %260 = arith.divf %258, %259 : vector<8x1xf32>
    %261 = vector.broadcast %260 : vector<8x1xf32> to vector<8x32xf32>
    %262 = arith.subf %252, %261 : vector<8x32xf32>
    %263 = arith.mulf %262, %262 : vector<8x32xf32>
    %cst_101 = arith.constant dense<0.000000e+00> : vector<8xf32>
    %264 = vector.multi_reduction <add>, %263, %cst_101 [1] : vector<8x32xf32> to vector<8xf32>
    %265 = vector.shape_cast %264 : vector<8xf32> to vector<8x1xf32>
    %cst_102 = arith.constant 3.100000e+01 : f32
    %266 = vector.broadcast %cst_102 : f32 to vector<8x1xf32>
    %267 = arith.divf %265, %266 : vector<8x1xf32>
    %268 = math.sqrt %267 : vector<8x1xf32>
    %269 = vector.broadcast %260 : vector<8x1xf32> to vector<8x32xf32>
    %270 = arith.subf %252, %269 : vector<8x32xf32>
    %cst_103 = arith.constant 9.99999974E-6 : f32
    %271 = vector.broadcast %cst_103 : f32 to vector<8x1xf32>
    %272 = arith.addf %268, %271 : vector<8x1xf32>
    %273 = vector.broadcast %272 : vector<8x1xf32> to vector<8x32xf32>
    %274 = arith.divf %270, %273 : vector<8x32xf32>
    %275 = vector.broadcast %254 : vector<1x32xf32> to vector<8x32xf32>
    %276 = arith.mulf %274, %275 : vector<8x32xf32>
    %277 = vector.broadcast %256 : vector<1x32xf32> to vector<8x32xf32>
    %278 = arith.addf %276, %277 : vector<8x32xf32>
    %279 = math.tanh %278 : vector<8x32xf32>
    %280 = arith.mulf %248, %279 : vector<8x32xf32>
    %281 = tpu.concatenate %168, %140, %280, %252 in 1 : vector<8x32xf32>, vector<8x32xf32>, vector<8x32xf32>, vector<8x32xf32> -> vector<8x128xf32>
    %c0_104 = arith.constant 0 : index
    %c0_105 = arith.constant 0 : index
    %282 = vector.load %arg19[%c0_104, %c0_105] : memref<8x128xf32, #tpu.memory_space<vmem>>, vector<8x128xf32>
    tpu.vector_store %arg19[%c0_104, %c0_105], %281 {strides = array<i32>} : memref<8x128xf32, #tpu.memory_space<vmem>>, vector<8x128xf32>,
    %c0_106 = arith.constant 0 : index
    %c0_107 = arith.constant 0 : index
    %283 = vector.load %arg15[%c0_106, %c0_107] : memref<1x32xf32, #tpu.memory_space<vmem>>, vector<1x32xf32>
    %284 = vector.broadcast %283 : vector<1x32xf32> to vector<8x32xf32>
    %285 = arith.mulf %280, %284 : vector<8x32xf32>
    %cst_108 = arith.constant dense<0.000000e+00> : vector<8xf32>
    %286 = vector.multi_reduction <add>, %285, %cst_108 [1] : vector<8x32xf32> to vector<8xf32>
    %287 = vector.shape_cast %286 : vector<8xf32> to vector<8x1xf32>
    %c0_109 = arith.constant 0 : index
    %c0_110 = arith.constant 0 : index
    %288 = vector.load %arg16[%c0_109, %c0_110] : memref<1x1xf32, #tpu.memory_space<vmem>>, vector<1x1xf32>
    %289 = vector.broadcast %288 : vector<1x1xf32> to vector<8x1xf32>
    %290 = arith.addf %287, %289 : vector<8x1xf32>
    %c0_111 = arith.constant 0 : index
    %c0_112 = arith.constant 0 : index
    %291 = vector.load %arg18[%c0_111, %c0_112] : memref<8x1xf32, #tpu.memory_space<vmem>>, vector<8x1xf32>
    tpu.vector_store %arg18[%c0_111, %c0_112], %290 {strides = array<i32>} : memref<8x1xf32, #tpu.memory_space<vmem>>, vector<8x1xf32>,
    return
  }
  func.func @transform_0(%arg0: i32) -> (i32, i32) {
    %c0_i32 = arith.constant 0 : i32
    %c0_i32_0 = arith.constant 0 : i32
    return %arg0, %c0_i32 : i32, i32
  }
  func.func @transform_1(%arg0: i32) -> (i32, i32) {
    %c0_i32 = arith.constant 0 : i32
    %c0_i32_0 = arith.constant 0 : i32
    %c0_i32_1 = arith.constant 0 : i32
    return %c0_i32, %c0_i32_0 : i32, i32
  }
  func.func @transform_2(%arg0: i32) -> (i32, i32) {
    %c0_i32 = arith.constant 0 : i32
    %c0_i32_0 = arith.constant 0 : i32
    %c0_i32_1 = arith.constant 0 : i32
    return %c0_i32, %c0_i32_0 : i32, i32
  }
  func.func @transform_3(%arg0: i32) -> (i32, i32) {
    %c0_i32 = arith.constant 0 : i32
    %c0_i32_0 = arith.constant 0 : i32
    %c0_i32_1 = arith.constant 0 : i32
    return %c0_i32, %c0_i32_0 : i32, i32
  }
  func.func @transform_4(%arg0: i32) -> (i32, i32) {
    %c0_i32 = arith.constant 0 : i32
    %c0_i32_0 = arith.constant 0 : i32
    %c0_i32_1 = arith.constant 0 : i32
    return %c0_i32, %c0_i32_0 : i32, i32
  }
  func.func @transform_5(%arg0: i32) -> (i32, i32, i32) {
    %c0_i32 = arith.constant 0 : i32
    %c0_i32_0 = arith.constant 0 : i32
    %c0_i32_1 = arith.constant 0 : i32
    %c0_i32_2 = arith.constant 0 : i32
    return %c0_i32, %c0_i32_0, %c0_i32_1 : i32, i32, i32
  }
  func.func @transform_6(%arg0: i32) -> (i32, i32, i32) {
    %c0_i32 = arith.constant 0 : i32
    %c0_i32_0 = arith.constant 0 : i32
    %c0_i32_1 = arith.constant 0 : i32
    %c0_i32_2 = arith.constant 0 : i32
    return %c0_i32, %c0_i32_0, %c0_i32_1 : i32, i32, i32
  }
  func.func @transform_7(%arg0: i32) -> (i32, i32, i32) {
    %c0_i32 = arith.constant 0 : i32
    %c0_i32_0 = arith.constant 0 : i32
    %c0_i32_1 = arith.constant 0 : i32
    %c0_i32_2 = arith.constant 0 : i32
    return %c0_i32, %c0_i32_0, %c0_i32_1 : i32, i32, i32
  }
  func.func @transform_8(%arg0: i32) -> (i32, i32, i32) {
    %c0_i32 = arith.constant 0 : i32
    %c0_i32_0 = arith.constant 0 : i32
    %c0_i32_1 = arith.constant 0 : i32
    %c0_i32_2 = arith.constant 0 : i32
    return %c0_i32, %c0_i32_0, %c0_i32_1 : i32, i32, i32
  }
  func.func @transform_9(%arg0: i32) -> (i32, i32, i32) {
    %c0_i32 = arith.constant 0 : i32
    %c0_i32_0 = arith.constant 0 : i32
    %c0_i32_1 = arith.constant 0 : i32
    %c0_i32_2 = arith.constant 0 : i32
    return %c0_i32, %c0_i32_0, %c0_i32_1 : i32, i32, i32
  }
  func.func @transform_10(%arg0: i32) -> (i32, i32, i32) {
    %c0_i32 = arith.constant 0 : i32
    %c0_i32_0 = arith.constant 0 : i32
    %c0_i32_1 = arith.constant 0 : i32
    %c0_i32_2 = arith.constant 0 : i32
    return %c0_i32, %c0_i32_0, %c0_i32_1 : i32, i32, i32
  }
  func.func @transform_11(%arg0: i32) -> (i32, i32, i32) {
    %c0_i32 = arith.constant 0 : i32
    %c0_i32_0 = arith.constant 0 : i32
    %c0_i32_1 = arith.constant 0 : i32
    %c0_i32_2 = arith.constant 0 : i32
    return %c0_i32, %c0_i32_0, %c0_i32_1 : i32, i32, i32
  }
  func.func @transform_12(%arg0: i32) -> (i32, i32, i32) {
    %c0_i32 = arith.constant 0 : i32
    %c0_i32_0 = arith.constant 0 : i32
    %c0_i32_1 = arith.constant 0 : i32
    %c0_i32_2 = arith.constant 0 : i32
    return %c0_i32, %c0_i32_0, %c0_i32_1 : i32, i32, i32
  }
  func.func @transform_13(%arg0: i32) -> (i32, i32, i32) {
    %c0_i32 = arith.constant 0 : i32
    %c0_i32_0 = arith.constant 0 : i32
    %c0_i32_1 = arith.constant 0 : i32
    %c0_i32_2 = arith.constant 0 : i32
    return %c0_i32, %c0_i32_0, %c0_i32_1 : i32, i32, i32
  }
  func.func @transform_14(%arg0: i32) -> (i32, i32) {
    %c0_i32 = arith.constant 0 : i32
    %c0_i32_0 = arith.constant 0 : i32
    %c0_i32_1 = arith.constant 0 : i32
    return %c0_i32, %c0_i32_0 : i32, i32
  }
  func.func @transform_15(%arg0: i32) -> (i32, i32) {
    %c0_i32 = arith.constant 0 : i32
    %c0_i32_0 = arith.constant 0 : i32
    %c0_i32_1 = arith.constant 0 : i32
    return %c0_i32, %c0_i32_0 : i32, i32
  }
  func.func @transform_16(%arg0: i32) -> (i32, i32) {
    %c0_i32 = arith.constant 0 : i32
    %c0_i32_0 = arith.constant 0 : i32
    return %arg0, %c0_i32 : i32, i32
  }
  func.func @transform_17(%arg0: i32) -> (i32, i32) {
    %c0_i32 = arith.constant 0 : i32
    %c0_i32_0 = arith.constant 0 : i32
    return %arg0, %c0_i32 : i32, i32
  }
  func.func @transform_18(%arg0: i32) -> (i32, i32) {
    %c0_i32 = arith.constant 0 : i32
    %c0_i32_0 = arith.constant 0 : i32
    return %arg0, %c0_i32 : i32, i32
  }
}

</mosaic_0001>

<llo_original>
// kernel: tpu_custom_call.1
$region0: #{tpu_custom_call.1}
  #allocation0 [shape = 'u32[]', space=smem, size = 0x4, offset = 0x4, fixed_abs, tag = 'smem constant byte address 0x4 - core index']
  #allocation1 [shape = 'u32[144,128]{1,0:T(1,128)}', space=vmem, size = 0x12000, scoped, tag = 'internal scratch']
  #allocation2 [shape = 'f32[1,1]{1,0:T(1,128)S(1)}', space=vmem, size = 0x200, scoped, tag = 'scoped memory for tpu_custom_call.1']
  %s0 = inlined_call_operand.vmem [shape: f32[8,3], index: 0, kind: input, shape index: {}]
  %s1 = inlined_call_operand.vmem [shape: f32[3,32], index: 1, kind: input, shape index: {}]
  %s2 = inlined_call_operand.vmem [shape: f32[1,32], index: 2, kind: input, shape index: {}]
  %s3 = inlined_call_operand.vmem [shape: f32[1,32], index: 3, kind: input, shape index: {}]
  %s4 = inlined_call_operand.vmem [shape: f32[1,32], index: 4, kind: input, shape index: {}]
  %s5 = inlined_call_operand.hbm [shape: f32[2,64,256], index: 5, kind: input, shape index: {}]
  %s6 = inlined_call_operand.vmem [shape: f32[2,1,128], index: 6, kind: input, shape index: {}]
  %s7 = inlined_call_operand.vmem [shape: f32[2,1,128], index: 7, kind: input, shape index: {}]
  %s8 = inlined_call_operand.vmem [shape: f32[2,1,128], index: 8, kind: input, shape index: {}]
  %s9 = inlined_call_operand.vmem [shape: f32[2,1,128], index: 9, kind: input, shape index: {}]
  %s10 = inlined_call_operand.vmem [shape: f32[2,1,128], index: 10, kind: input, shape index: {}]
  %s11 = inlined_call_operand.vmem [shape: f32[2,1,128], index: 11, kind: input, shape index: {}]
  %s12 = inlined_call_operand.vmem [shape: f32[2,1,32], index: 12, kind: input, shape index: {}]
  %s13 = inlined_call_operand.vmem [shape: f32[2,1,32], index: 13, kind: input, shape index: {}]
  %s14 = inlined_call_operand.vmem [shape: f32[1,32], index: 14, kind: input, shape index: {}]
  %s15 = inlined_call_operand.<no memory space> [shape: f32[1,1], index: 15, kind: input, shape index: {}]
  %s16 = inlined_call_operand.vmem [shape: f32[8,128], index: 16, kind: input, shape index: {}, may-alias: {16,18}]
  %s17 = inlined_call_operand.vmem [shape: f32[8,1], index: 17, kind: output, shape index: {0}]
  %s18 = inlined_call_operand.vmem [shape: f32[8,128], index: 18, kind: output, shape index: {1}, may-alias: {16,18}]
  %19 = xla_tuple %s17, %s18
  %s20 = sld [smem:[#allocation0]]
  $region90: #{tpu_custom_call.1} parent=0
    _
  %s22 = ssub.s32 1, %s20
  %s23 = scalar_select 0, %s22, %s20
  %v24 = vstv %s15
  %25 = vst [vmem:[#allocation2] sm:$0x1] %v24
  $region1: #{tpu_custom_call.1} parent=0
    #allocation3 [shape = 'u8[131072]{0}', space=vmem, size = 0x20000, scoped, tag = 'input window, operand 5, single buffered']
    #allocation4 [shape = 's32[1]{0}', space=sflag, size = 0x4, scoped, tag = 'scoped memory for tpu_custom_call.1']
    %26 = vsyncpa [#allocation4], 0
    // Predicated region
    $region2: #{tpu_custom_call.1} parent=1 // pred_check
      _
    $region3: #{tpu_custom_call.1} parent=1 // pred_check_branch
      %28 = sbr.rel (0) target = $region5
    $region4: #{tpu_custom_call.1} parent=1 // pred_region
      _
    $region5: #{tpu_custom_call.1} parent=1 // pred_fallthru
      _
    // Predicated region
    $region6: #{tpu_custom_call.1} parent=1 // pred_check
      _
    $region7: #{tpu_custom_call.1} parent=1 // pred_check_branch
      %30 = sbr.rel (0) target = $region9
    $region8: #{tpu_custom_call.1} parent=1 // pred_region
      _
    $region9: #{tpu_custom_call.1} parent=1 // pred_fallthru
      _
    // Predicated region
    $region10: #{tpu_custom_call.1} parent=1 // pred_check
      _
    $region11: #{tpu_custom_call.1} parent=1 // pred_check_branch
      %32 = sbr.rel (0) target = $region13
    $region12: #{tpu_custom_call.1} parent=1 // pred_region
      _
    $region13: #{tpu_custom_call.1} parent=1 // pred_fallthru
      _
    // Predicated region
    $region14: #{tpu_custom_call.1} parent=1 // pred_check
      _
    $region15: #{tpu_custom_call.1} parent=1 // pred_check_branch
      %34 = sbr.rel (0) target = $region17
    $region16: #{tpu_custom_call.1} parent=1 // pred_region
      _
    $region17: #{tpu_custom_call.1} parent=1 // pred_fallthru
      _
    // Predicated region
    $region18: #{tpu_custom_call.1} parent=1 // pred_check
      _
    $region19: #{tpu_custom_call.1} parent=1 // pred_check_branch
      %36 = sbr.rel (0) target = $region21
    $region20: #{tpu_custom_call.1} parent=1 // pred_region
      _
    $region21: #{tpu_custom_call.1} parent=1 // pred_fallthru
      _
    // Predicated region
    $region22: #{tpu_custom_call.1} parent=1 // pred_check
      _
    $region23: #{tpu_custom_call.1} parent=1 // pred_check_branch
      %38 = sbr.rel (0) target = $region25
    $region24: #{tpu_custom_call.1} parent=1 // pred_region
      %s40 = ssub.s32 4096, 4096
      %41 = vsyncadd [#allocation4], %s40
      %s42 = sshll.u32 [#allocation3], 4
      %s43 = int_to_ptr.vmem [resolvable:$true] %s42
      %48 = dma.hbm_to_vmem [thread:$0]  %s5, 4096, %s43, [#allocation4], 256, 256, 16
    $region25: #{tpu_custom_call.1} parent=1 // pred_fallthru
      _
    // Predicated region
    $region26: #{tpu_custom_call.1} parent=1 // pred_check
      _
    $region27: #{tpu_custom_call.1} parent=1 // pred_check_branch
      %50 = sbr.rel (0) target = $region29
    $region28: #{tpu_custom_call.1} parent=1 // pred_region
      _
    $region29: #{tpu_custom_call.1} parent=1 // pred_fallthru
      _
    // Predicated region
    $region30: #{tpu_custom_call.1} parent=1 // pred_check
      _
    $region31: #{tpu_custom_call.1} parent=1 // pred_check_branch
      %52 = sbr.rel (0) target = $region33
    $region32: #{tpu_custom_call.1} parent=1 // pred_region
      _
    $region33: #{tpu_custom_call.1} parent=1 // pred_fallthru
      _
    // Predicated region
    $region34: #{tpu_custom_call.1} parent=1 // pred_check
      _
    $region35: #{tpu_custom_call.1} parent=1 // pred_check_branch
      %54 = sbr.rel (0) target = $region37
    $region36: #{tpu_custom_call.1} parent=1 // pred_region
      _
    $region37: #{tpu_custom_call.1} parent=1 // pred_fallthru
      _
    // Predicated region
    $region38: #{tpu_custom_call.1} parent=1 // pred_check
      _
    $region39: #{tpu_custom_call.1} parent=1 // pred_check_branch
      %56 = sbr.rel (0) target = $region41
    $region40: #{tpu_custom_call.1} parent=1 // pred_region
      _
    $region41: #{tpu_custom_call.1} parent=1 // pred_fallthru
      _
    // Predicated region
    $region42: #{tpu_custom_call.1} parent=1 // pred_check
      _
    $region43: #{tpu_custom_call.1} parent=1 // pred_check_branch
      %58 = sbr.rel (0) target = $region45
    $region44: #{tpu_custom_call.1} parent=1 // pred_region
      _
    $region45: #{tpu_custom_call.1} parent=1 // pred_fallthru
      _
    // Predicated region
    $region46: #{tpu_custom_call.1} parent=1 // pred_check
      _
    $region47: #{tpu_custom_call.1} parent=1 // pred_check_branch
      %60 = sbr.rel (0) target = $region49
    $region48: #{tpu_custom_call.1} parent=1 // pred_region
      _
    $region49: #{tpu_custom_call.1} parent=1 // pred_fallthru
      _
    // Predicated region
    $region50: #{tpu_custom_call.1} parent=1 // pred_check
      _
    $region51: #{tpu_custom_call.1} parent=1 // pred_check_branch
      %62 = sbr.rel (0) target = $region53
    $region52: #{tpu_custom_call.1} parent=1 // pred_region
      _
    $region53: #{tpu_custom_call.1} parent=1 // pred_fallthru
      _
    // Predicated region
    $region54: #{tpu_custom_call.1} parent=1 // pred_check
      _
    $region55: #{tpu_custom_call.1} parent=1 // pred_check_branch
      %64 = sbr.rel (0) target = $region57
    $region56: #{tpu_custom_call.1} parent=1 // pred_region
      _
    $region57: #{tpu_custom_call.1} parent=1 // pred_fallthru
      _
    // Predicated region
    $region58: #{tpu_custom_call.1} parent=1 // pred_check
      _
    $region59: #{tpu_custom_call.1} parent=1 // pred_check_branch
      %66 = sbr.rel (0) target = $region61
    $region60: #{tpu_custom_call.1} parent=1 // pred_region
      _
    $region61: #{tpu_custom_call.1} parent=1 // pred_fallthru
      _
    // Predicated region
    $region62: #{tpu_custom_call.1} parent=1 // pred_check
      _
    $region63: #{tpu_custom_call.1} parent=1 // pred_check_branch
      %68 = sbr.rel (0) target = $region65
    $region64: #{tpu_custom_call.1} parent=1 // pred_region
      _
    $region65: #{tpu_custom_call.1} parent=1 // pred_fallthru
      _
    // Predicated region
    $region66: #{tpu_custom_call.1} parent=1 // pred_check
      _
    $region67: #{tpu_custom_call.1} parent=1 // pred_check_branch
      %70 = sbr.rel (0) target = $region69
    $region68: #{tpu_custom_call.1} parent=1 // pred_region
      _
    $region69: #{tpu_custom_call.1} parent=1 // pred_fallthru
      _
    // Predicated region
    $region70: #{tpu_custom_call.1} parent=1 // pred_check
      _
    $region71: #{tpu_custom_call.1} parent=1 // pred_check_branch
      %72 = sbr.rel (0) target = $region73
    $region72: #{tpu_custom_call.1} parent=1 // pred_region
      %73 = dma.done [#allocation4], 4096
    $region73: #{tpu_custom_call.1} parent=1 // pred_fallthru
      _
    %v74 = vld [vmem:[%s0] sm:$0xff]
    %v75 = vld [vmem:[%s1] sm:$0x7]
    %77 = vset.pattern.permute.xlu0 0
    %78 = vperm.xlu0 %77, %v74
    %v79 = vpop.permute.xlu0 %78
    %v81 = vlaneseq
    %v82 = vshrl.u32 %v81, 7
    %v83 = vsub.s32 0, %v82
    %v84 = vrot.slane %v75, %v83
    %v85 = vmul.f32 %v79, %v84
    %86 = vset.pattern.permute.xlu0 1
    %87 = vperm.xlu0 %86, %v74
    %v88 = vpop.permute.xlu0 %87
    %v90 = vlaneseq
    %v91 = vshrl.u32 %v90, 7
    %v92 = vsub.s32 1, %v91
    %v93 = vrot.slane %v75, %v92
    %v94 = vmul.f32 %v88, %v93
    %v95 = vadd.f32 %v85, %v94
    %96 = vset.pattern.permute.xlu0 2
    %97 = vperm.xlu0 %96, %v74
    %v98 = vpop.permute.xlu0 %97
    %v100 = vlaneseq
    %v101 = vshrl.u32 %v100, 7
    %v102 = vsub.s32 2, %v101
    %v103 = vrot.slane %v75, %v102
    %v104 = vmul.f32 %v98, %v103
    %v105 = vadd.f32 %v95, %v104
    %v106 = vld [vmem:[%s2] sm:$0x1]
    %v108 = vlaneseq
    %v109 = vshrl.u32 %v108, 7
    %v110 = vsub.s32 0, %v109
    %v111 = vrot.slane %v106, %v110
    %v113 = vadd.f32 %v105, %v111
    %v114 = vld [vmem:[%s3] sm:$0x1]
    %v115 = vld [vmem:[%s4] sm:$0x1]
    %vm116 = vcmask 261120
    %v117 = vsel %vm116, %v113, 0.0
    %118 = vadd.xlane.f32.xlu0 %v117
    %v119 = vpop.xlane.xlu0 %118
    %v120 = vrcp.pop 32.0
    %v121 = vmul.f32 %v119, %v120
    %v122 = vsub.f32 %v113, %v121
    %v123 = vmul.f32 %v122, %v122
    %v124 = vsel %vm116, %v123, 0.0
    %125 = vadd.xlane.f32.xlu0 %v124
    %v126 = vpop.xlane.xlu0 %125
    %v127 = vrcp.pop 31.0
    %v128 = vmul.f32 %v126, %v127
    %v129 = vrsqrt.pop %v128
    %v130 = vmul.f32 %v128, %v129
    %vm131 = vcmp.eq.f32.partialorder %v128, inf
    %v132 = vsel %vm131, %v128, %v130
    %vm133 = vcmp.eq.f32.partialorder %v128, 0.0
    %v134 = vand.u32 %v128, 2147483648
    %v135 = vsel %vm133, %v134, %v132
    %v136 = vadd.f32 %v135, 1e-05
    %v137 = vrcp.pop %v136
    %v138 = vmul.f32 %v122, %v137
    %v140 = vlaneseq
    %v141 = vshrl.u32 %v140, 7
    %v142 = vsub.s32 0, %v141
    %v143 = vrot.slane %v114, %v142
    %v145 = vmul.f32 %v138, %v143
    %v147 = vlaneseq
    %v148 = vshrl.u32 %v147, 7
    %v149 = vsub.s32 0, %v148
    %v150 = vrot.slane %v115, %v149
    %v152 = vadd.f32 %v145, %v150
    %v153 = vtanh.pop %v152
    %v154 = vlaneseq
    %v155 = vand.u32 %v154, 127
    %vm156 = vcmp.ge.s32.totalorder %v155, 32
    %vm157 = vcmp.lt.s32.totalorder %v155, 64
    %vm158 = vmand %vm156, %vm157
    %v159 = vsel %vm158, -1.0, 0.0
    %v160 = vld [vmem:[%s16] sm:$0xff]
    %162 = vrot.lane.b32.xlu0 %v160, 32
    %v163 = vpop.permute.xlu0 %162
    %v165 = vsel %vm116, %v153, %v163
    %v166 = vld [vmem:[#allocation3] sm:$0xff]
    %v167 = vld [vmem:[#allocation3 + $0x8] sm:$0xff]
    %v168 = vld [vmem:[#allocation3 + $0x10] sm:$0xff]
    %v169 = vld [vmem:[#allocation3 + $0x18] sm:$0xff]
    %v170 = vld [vmem:[#allocation3 + $0x20] sm:$0xff]
    %v171 = vld [vmem:[#allocation3 + $0x28] sm:$0xff]
    %v172 = vld [vmem:[#allocation3 + $0x30] sm:$0xff]
    %v173 = vld [vmem:[#allocation3 + $0x38] sm:$0xff]
    %v174 = vld [vmem:[#allocation3 + $0x40] sm:$0xff]
    %v175 = vld [vmem:[#allocation3 + $0x48] sm:$0xff]
    %v176 = vld [vmem:[#allocation3 + $0x50] sm:$0xff]
    %v177 = vld [vmem:[#allocation3 + $0x58] sm:$0xff]
    %v178 = vld [vmem:[#allocation3 + $0x60] sm:$0xff]
    %v179 = vld [vmem:[#allocation3 + $0x68] sm:$0xff]
    %v180 = vld [vmem:[#allocation3 + $0x70] sm:$0xff]
    %v181 = vld [vmem:[#allocation3 + $0x78] sm:$0xff]
    %vm182 = vcmask 523264
    %v184 = vsel %vm182, %v165, 0
    %186 = vmatprep.subr.mxu0 %v167
    %187 = vmatpush1.msra.mxu0 %v166
    %188 = vmatprep.subr.mxu0 %v169
    %189 = vmatpush1.msra.mxu0 %v168
    %190 = vmatprep.subr.mxu0 %v171
    %191 = vmatpush1.msra.mxu0 %v170
    %192 = vmatprep.subr.mxu0 %v173
    %193 = vmatpush1.msra.mxu0 %v172
    %194 = vmatprep.subr.mxu0 %v175
    %195 = vmatpush1.msra.mxu0 %v174
    %196 = vmatprep.subr.mxu0 %v177
    %197 = vmatpush1.msra.mxu0 %v176
    %198 = vmatprep.subr.mxu0 %v179
    %199 = vmatpush1.msra.mxu0 %v178
    %200 = vmatprep.subr.mxu0 %v181
    %201 = vmatpush1.msra.mxu0 %v180
    %202 = vmatprep.subr.mxu0 0.0
    %203 = vmatpush1.msra.mxu0 0.0
    %204 = vmatprep.subr.mxu0 0.0
    %205 = vmatpush1.msra.mxu0 0.0
    %206 = vmatprep.subr.mxu0 0.0
    %207 = vmatpush1.msra.mxu0 0.0
    %208 = vmatprep.subr.mxu0 0.0
    %209 = vmatpush1.msra.mxu0 0.0
    %210 = vmatprep.subr.mxu0 0.0
    %211 = vmatpush1.msra.mxu0 0.0
    %212 = vmatprep.subr.mxu0 0.0
    %213 = vmatpush1.msra.mxu0 0.0
    %214 = vmatprep.subr.mxu0 0.0
    %215 = vmatpush1.msra.mxu0 0.0
    %216 = vmatprep.subr.mxu0 0.0
    %217 = vmatpush1.msra.mxu0 0.0
    %218 = vmatprep.subr.mxu0 0.0
    %219 = vmatpush1.msra.mxu0 0.0
    %220 = vmatprep.subr.mxu0 0.0
    %221 = vmatpush1.msra.mxu0 0.0
    %222 = vmatprep.subr.mxu0 0.0
    %223 = vmatpush1.msra.mxu0 0.0
    %224 = vmatprep.subr.mxu0 0.0
    %225 = vmatpush1.msra.mxu0 0.0
    %226 = vmatprep.subr.mxu0 0.0
    %227 = vmatpush1.msra.mxu0 0.0
    %228 = vmatprep.subr.mxu0 0.0
    %229 = vmatpush1.msra.mxu0 0.0
    %230 = vmatprep.subr.mxu0 0.0
    %231 = vmatpush1.msra.mxu0 0.0
    %232 = vmatprep.subr.mxu0 0.0
    %233 = vmatpush1.msra.mxu0 0.0
    %234 = vmatprep.subr.mxu0 0.0
    %235 = vmatpush1.msra.mxu0 0.0
    %236 = vmatprep.subr.mxu0 0.0
    %237 = vmatpush1.msra.mxu0 0.0
    %238 = vmatprep.subr.mxu0 0.0
    %239 = vmatpush1.msra.mxu0 0.0
    %240 = vmatprep.subr.mxu0 0.0
    %241 = vmatpush1.msra.mxu0 0.0
    %242 = vmatprep.subr.mxu0 0.0
    %243 = vmatpush1.msra.mxu0 0.0
    %244 = vmatprep.subr.mxu0 0.0
    %245 = vmatpush1.msra.mxu0 0.0
    %246 = vmatprep.subr.mxu0 0.0
    %247 = vmatpush1.msra.mxu0 0.0
    %248 = vmatprep.subr.mxu0 0.0
    %249 = vmatpush1.msra.mxu0 0.0
    %250 = vmatprep.mubr.f32.mxu0 0.0
    %251 = vmatmul.mubr.f32.gmra.mrb[0].mxu0 %v184
    %v252 = vpop.f32.mrb[0].mxu0
    %v253 = vadd.f32 0.0, %v252
    %v254 = vpop.f32.mrb[0].mxu0
    %v255 = vadd.f32 0.0, %v254
    %256 = vdwg.mxu0
    %v257 = vld [vmem:[%s6] sm:$0x1]
    %v259 = vlaneseq
    %v260 = vshrl.u32 %v259, 7
    %v261 = vsub.s32 0, %v260
    %v262 = vrot.slane %v257, %v261
    %v264 = vadd.f32 %v253, %v262
    %v265 = vld [vmem:[%s7] sm:$0x1]
    %v267 = vlaneseq
    %v268 = vshrl.u32 %v267, 7
    %v269 = vsub.s32 0, %v268
    %v270 = vrot.slane %v265, %v269
    %v272 = vadd.f32 %v255, %v270
    %v273 = vld [vmem:[%s8] sm:$0x1]
    %v274 = vld [vmem:[%s9] sm:$0x1]
    %275 = vadd.xlane.f32.xlu0 %v264
    %v276 = vpop.xlane.xlu0 %275
    %v277 = vrcp.pop 128.0
    %v278 = vmul.f32 %v276, %v277
    %v279 = vsub.f32 %v264, %v278
    %v280 = vmul.f32 %v279, %v279
    %281 = vadd.xlane.f32.xlu0 %v280
    %v282 = vpop.xlane.xlu0 %281
    %v283 = vrcp.pop 127.0
    %v284 = vmul.f32 %v282, %v283
    %v285 = vrsqrt.pop %v284
    %v286 = vmul.f32 %v284, %v285
    %vm287 = vcmp.eq.f32.partialorder %v284, inf
    %v288 = vsel %vm287, %v284, %v286
    %vm289 = vcmp.eq.f32.partialorder %v284, 0.0
    %v290 = vand.u32 %v284, 2147483648
    %v291 = vsel %vm289, %v290, %v288
    %v292 = vadd.f32 %v291, 1e-05
    %v293 = vrcp.pop %v292
    %v294 = vmul.f32 %v279, %v293
    %v296 = vlaneseq
    %v297 = vshrl.u32 %v296, 7
    %v298 = vsub.s32 0, %v297
    %v299 = vrot.slane %v273, %v298
    %v301 = vmul.f32 %v294, %v299
    %v303 = vlaneseq
    %v304 = vshrl.u32 %v303, 7
    %v305 = vsub.s32 0, %v304
    %v306 = vrot.slane %v274, %v305
    %v308 = vadd.f32 %v301, %v306
    %v309 = vld [vmem:[%s10] sm:$0x1]
    %v310 = vld [vmem:[%s11] sm:$0x1]
    %311 = vadd.xlane.f32.xlu0 %v272
    %v312 = vpop.xlane.xlu0 %311
    %v313 = vmul.f32 %v312, %v277
    %v314 = vsub.f32 %v272, %v313
    %v315 = vmul.f32 %v314, %v314
    %316 = vadd.xlane.f32.xlu0 %v315
    %v317 = vpop.xlane.xlu0 %316
    %v318 = vmul.f32 %v317, %v283
    %v319 = vrsqrt.pop %v318
    %v320 = vmul.f32 %v318, %v319
    %vm321 = vcmp.eq.f32.partialorder %v318, inf
    %v322 = vsel %vm321, %v318, %v320
    %vm323 = vcmp.eq.f32.partialorder %v318, 0.0
    %v324 = vand.u32 %v318, 2147483648
    %v325 = vsel %vm323, %v324, %v322
    %v326 = vadd.f32 %v325, 1e-05
    %v327 = vrcp.pop %v326
    %v328 = vmul.f32 %v314, %v327
    %v330 = vlaneseq
    %v331 = vshrl.u32 %v330, 7
    %v332 = vsub.s32 0, %v331
    %v333 = vrot.slane %v309, %v332
    %v335 = vmul.f32 %v328, %v333
    %v337 = vlaneseq
    %v338 = vshrl.u32 %v337, 7
    %v339 = vsub.s32 0, %v338
    %v340 = vrot.slane %v310, %v339
    %v342 = vadd.f32 %v335, %v340
    %v343 = vadd.f32 %v308, %v342
    %v344 = vadd.f32 %v343, %v159
    %v345 = vxor.u32 %v344, 2147483648
    %v346 = vmul.f32 %v345, 1.442695
    %v347 = vpow.pop %v346
    %v348 = vadd.f32 %v347, 1.0
    %v349 = vrcp.pop %v348
    %v350 = vmul.f32 1.0, %v349
    %v351 = vtanh.pop %v343
    %v352 = vmul.f32 %v350, %v160
    %354 = vrot.lane.b32.xlu0 %v351, 32
    %v355 = vpop.permute.xlu0 %354
    %v357 = vmul.f32 %v350, %v355
    %359 = vrot.lane.b32.xlu0 %v357, 32
    %v360 = vpop.permute.xlu0 %359
    %v362 = vadd.f32 %v352, %v360
    %v363 = vld [vmem:[%s12] sm:$0x1]
    %v364 = vld [vmem:[%s13] sm:$0x1]
    %366 = vrot.lane.b32.xlu0 %v362, 96
    %v367 = vpop.permute.xlu0 %366
    %v369 = vsel %vm116, %v367, 0.0
    %370 = vadd.xlane.f32.xlu0 %v369
    %v371 = vpop.xlane.xlu0 %370
    %v372 = vmul.f32 %v371, %v120
    %v373 = vsub.f32 %v362, %v372
    %v374 = vmul.f32 %v373, %v373
    %376 = vrot.lane.b32.xlu0 %v374, 96
    %v377 = vpop.permute.xlu0 %376
    %v379 = vsel %vm116, %v377, 0.0
    %380 = vadd.xlane.f32.xlu0 %v379
    %v381 = vpop.xlane.xlu0 %380
    %v382 = vmul.f32 %v381, %v127
    %v383 = vrsqrt.pop %v382
    %v384 = vmul.f32 %v382, %v383
    %vm385 = vcmp.eq.f32.partialorder %v382, inf
    %v386 = vsel %vm385, %v382, %v384
    %vm387 = vcmp.eq.f32.partialorder %v382, 0.0
    %v388 = vand.u32 %v382, 2147483648
    %v389 = vsel %vm387, %v388, %v386
    %v390 = vadd.f32 %v389, 1e-05
    %v391 = vrcp.pop %v390
    %v392 = vmul.f32 %v373, %v391
    %v394 = vlaneseq
    %v395 = vshrl.u32 %v394, 7
    %v396 = vsub.s32 0, %v395
    %v397 = vrot.slane %v363, %v396
    %398 = vrot.lane.b32.xlu0 %v397, 32
    %v399 = vpop.permute.xlu0 %398
    %v401 = vmul.f32 %v392, %v399
    %v403 = vlaneseq
    %v404 = vshrl.u32 %v403, 7
    %v405 = vsub.s32 0, %v404
    %v406 = vrot.slane %v364, %v405
    %407 = vrot.lane.b32.xlu0 %v406, 32
    %v408 = vpop.permute.xlu0 %407
    %v410 = vadd.f32 %v401, %v408
    %v411 = vtanh.pop %v410
    %413 = vrot.lane.b32.xlu0 %v411, 32
    %v414 = vpop.permute.xlu0 %413
    %v416 = vmul.f32 %v350, %v414
    %418 = vrot.lane.b32.xlu0 %v416, 64
    %v419 = vpop.permute.xlu0 %418
    %421 = vrot.lane.b32.xlu0 %v160, 96
    %v422 = vpop.permute.xlu0 %421
    %v424 = vsel %vm116, %v419, %v422
    %s425 = scalar_lea.vmem [#allocation3], 128
    %v426 = vld [vmem:[%s425] sm:$0xff]
    %v427 = vld [vmem:[%s425 + $0x8] sm:$0xff]
    %v428 = vld [vmem:[%s425 + $0x10] sm:$0xff]
    %v429 = vld [vmem:[%s425 + $0x18] sm:$0xff]
    %v430 = vld [vmem:[%s425 + $0x20] sm:$0xff]
    %v431 = vld [vmem:[%s425 + $0x28] sm:$0xff]
    %v432 = vld [vmem:[%s425 + $0x30] sm:$0xff]
    %v433 = vld [vmem:[%s425 + $0x38] sm:$0xff]
    %v434 = vld [vmem:[%s425 + $0x40] sm:$0xff]
    %v435 = vld [vmem:[%s425 + $0x48] sm:$0xff]
    %v436 = vld [vmem:[%s425 + $0x50] sm:$0xff]
    %v437 = vld [vmem:[%s425 + $0x58] sm:$0xff]
    %v438 = vld [vmem:[%s425 + $0x60] sm:$0xff]
    %v439 = vld [vmem:[%s425 + $0x68] sm:$0xff]
    %v440 = vld [vmem:[%s425 + $0x70] sm:$0xff]
    %v441 = vld [vmem:[%s425 + $0x78] sm:$0xff]
    %v443 = vsel %vm182, %v424, 0
    %445 = vmatprep.subr.mxu0 %v427
    %446 = vmatpush1.msra.mxu0 %v426
    %447 = vmatprep.subr.mxu0 %v429
    %448 = vmatpush1.msra.mxu0 %v428
    %449 = vmatprep.subr.mxu0 %v431
    %450 = vmatpush1.msra.mxu0 %v430
    %451 = vmatprep.subr.mxu0 %v433
    %452 = vmatpush1.msra.mxu0 %v432
    %453 = vmatprep.subr.mxu0 %v435
    %454 = vmatpush1.msra.mxu0 %v434
    %455 = vmatprep.subr.mxu0 %v437
    %456 = vmatpush1.msra.mxu0 %v436
    %457 = vmatprep.subr.mxu0 %v439
    %458 = vmatpush1.msra.mxu0 %v438
    %459 = vmatprep.subr.mxu0 %v441
    %460 = vmatpush1.msra.mxu0 %v440
    %461 = vmatprep.subr.mxu0 0.0
    %462 = vmatpush1.msra.mxu0 0.0
    %463 = vmatprep.subr.mxu0 0.0
    %464 = vmatpush1.msra.mxu0 0.0
    %465 = vmatprep.subr.mxu0 0.0
    %466 = vmatpush1.msra.mxu0 0.0
    %467 = vmatprep.subr.mxu0 0.0
    %468 = vmatpush1.msra.mxu0 0.0
    %469 = vmatprep.subr.mxu0 0.0
    %470 = vmatpush1.msra.mxu0 0.0
    %471 = vmatprep.subr.mxu0 0.0
    %472 = vmatpush1.msra.mxu0 0.0
    %473 = vmatprep.subr.mxu0 0.0
    %474 = vmatpush1.msra.mxu0 0.0
    %475 = vmatprep.subr.mxu0 0.0
    %476 = vmatpush1.msra.mxu0 0.0
    %477 = vmatprep.subr.mxu0 0.0
    %478 = vmatpush1.msra.mxu0 0.0
    %479 = vmatprep.subr.mxu0 0.0
    %480 = vmatpush1.msra.mxu0 0.0
    %481 = vmatprep.subr.mxu0 0.0
    %482 = vmatpush1.msra.mxu0 0.0
    %483 = vmatprep.subr.mxu0 0.0
    %484 = vmatpush1.msra.mxu0 0.0
    %485 = vmatprep.subr.mxu0 0.0
    %486 = vmatpush1.msra.mxu0 0.0
    %487 = vmatprep.subr.mxu0 0.0
    %488 = vmatpush1.msra.mxu0 0.0
    %489 = vmatprep.subr.mxu0 0.0
    %490 = vmatpush1.msra.mxu0 0.0
    %491 = vmatprep.subr.mxu0 0.0
    %492 = vmatpush1.msra.mxu0 0.0
    %493 = vmatprep.subr.mxu0 0.0
    %494 = vmatpush1.msra.mxu0 0.0
    %495 = vmatprep.subr.mxu0 0.0
    %496 = vmatpush1.msra.mxu0 0.0
    %497 = vmatprep.subr.mxu0 0.0
    %498 = vmatpush1.msra.mxu0 0.0
    %499 = vmatprep.subr.mxu0 0.0
    %500 = vmatpush1.msra.mxu0 0.0
    %501 = vmatprep.subr.mxu0 0.0
    %502 = vmatpush1.msra.mxu0 0.0
    %503 = vmatprep.subr.mxu0 0.0
    %504 = vmatpush1.msra.mxu0 0.0
    %505 = vmatprep.subr.mxu0 0.0
    %506 = vmatpush1.msra.mxu0 0.0
    %507 = vmatprep.subr.mxu0 0.0
    %508 = vmatpush1.msra.mxu0 0.0
    %509 = vmatprep.mubr.f32.mxu0 0.0
    %510 = vmatmul.mubr.f32.gmra.mrb[0].mxu0 %v443
    %v511 = vpop.f32.mrb[0].mxu0
    %v512 = vadd.f32 0.0, %v511
    %v513 = vpop.f32.mrb[0].mxu0
    %v514 = vadd.f32 0.0, %v513
    %515 = vdwg.mxu0
    %s516 = scalar_lea.vmem %s6, 1
    %v517 = vld [vmem:[%s516] sm:$0x1]
    %v519 = vlaneseq
    %v520 = vshrl.u32 %v519, 7
    %v521 = vsub.s32 0, %v520
    %v522 = vrot.slane %v517, %v521
    %v524 = vadd.f32 %v512, %v522
    %s525 = scalar_lea.vmem %s7, 1
    %v526 = vld [vmem:[%s525] sm:$0x1]
    %v528 = vlaneseq
    %v529 = vshrl.u32 %v528, 7
    %v530 = vsub.s32 0, %v529
    %v531 = vrot.slane %v526, %v530
    %v533 = vadd.f32 %v514, %v531
    %s534 = scalar_lea.vmem %s8, 1
    %v535 = vld [vmem:[%s534] sm:$0x1]
    %s536 = scalar_lea.vmem %s9, 1
    %v537 = vld [vmem:[%s536] sm:$0x1]
    %538 = vadd.xlane.f32.xlu0 %v524
    %v539 = vpop.xlane.xlu0 %538
    %v540 = vmul.f32 %v539, %v277
    %v541 = vsub.f32 %v524, %v540
    %v542 = vmul.f32 %v541, %v541
    %543 = vadd.xlane.f32.xlu0 %v542
    %v544 = vpop.xlane.xlu0 %543
    %v545 = vmul.f32 %v544, %v283
    %v546 = vrsqrt.pop %v545
    %v547 = vmul.f32 %v545, %v546
    %vm548 = vcmp.eq.f32.partialorder %v545, inf
    %v549 = vsel %vm548, %v545, %v547
    %vm550 = vcmp.eq.f32.partialorder %v545, 0.0
    %v551 = vand.u32 %v545, 2147483648
    %v552 = vsel %vm550, %v551, %v549
    %v553 = vadd.f32 %v552, 1e-05
    %v554 = vrcp.pop %v553
    %v555 = vmul.f32 %v541, %v554
    %v557 = vlaneseq
    %v558 = vshrl.u32 %v557, 7
    %v559 = vsub.s32 0, %v558
    %v560 = vrot.slane %v535, %v559
    %v562 = vmul.f32 %v555, %v560
    %v564 = vlaneseq
    %v565 = vshrl.u32 %v564, 7
    %v566 = vsub.s32 0, %v565
    %v567 = vrot.slane %v537, %v566
    %v569 = vadd.f32 %v562, %v567
    %s570 = scalar_lea.vmem %s10, 1
    %v571 = vld [vmem:[%s570] sm:$0x1]
    %s572 = scalar_lea.vmem %s11, 1
    %v573 = vld [vmem:[%s572] sm:$0x1]
    %574 = vadd.xlane.f32.xlu0 %v533
    %v575 = vpop.xlane.xlu0 %574
    %v576 = vmul.f32 %v575, %v277
    %v577 = vsub.f32 %v533, %v576
    %v578 = vmul.f32 %v577, %v577
    %579 = vadd.xlane.f32.xlu0 %v578
    %v580 = vpop.xlane.xlu0 %579
    %v581 = vmul.f32 %v580, %v283
    %v582 = vrsqrt.pop %v581
    %v583 = vmul.f32 %v581, %v582
    %vm584 = vcmp.eq.f32.partialorder %v581, inf
    %v585 = vsel %vm584, %v581, %v583
    %vm586 = vcmp.eq.f32.partialorder %v581, 0.0
    %v587 = vand.u32 %v581, 2147483648
    %v588 = vsel %vm586, %v587, %v585
    %v589 = vadd.f32 %v588, 1e-05
    %v590 = vrcp.pop %v589
    %v591 = vmul.f32 %v577, %v590
    %v593 = vlaneseq
    %v594 = vshrl.u32 %v593, 7
    %v595 = vsub.s32 0, %v594
    %v596 = vrot.slane %v571, %v595
    %v598 = vmul.f32 %v591, %v596
    %v600 = vlaneseq
    %v601 = vshrl.u32 %v600, 7
    %v602 = vsub.s32 0, %v601
    %v603 = vrot.slane %v573, %v602
    %v605 = vadd.f32 %v598, %v603
    %v606 = vadd.f32 %v569, %v605
    %v607 = vadd.f32 %v606, %v159
    %v608 = vxor.u32 %v607, 2147483648
    %v609 = vmul.f32 %v608, 1.442695
    %v610 = vpow.pop %v609
    %v611 = vadd.f32 %v610, 1.0
    %v612 = vrcp.pop %v611
    %v613 = vmul.f32 1.0, %v612
    %v614 = vtanh.pop %v606
    %615 = vrot.lane.b32.xlu0 %v160, 64
    %v616 = vpop.permute.xlu0 %615
    %v618 = vmul.f32 %v613, %v616
    %620 = vrot.lane.b32.xlu0 %v614, 32
    %v621 = vpop.permute.xlu0 %620
    %v623 = vmul.f32 %v613, %v621
    %625 = vrot.lane.b32.xlu0 %v623, 32
    %v626 = vpop.permute.xlu0 %625
    %v628 = vadd.f32 %v618, %v626
    %s629 = scalar_lea.vmem %s12, 1
    %v630 = vld [vmem:[%s629] sm:$0x1]
    %s631 = scalar_lea.vmem %s13, 1
    %v632 = vld [vmem:[%s631] sm:$0x1]
    %634 = vrot.lane.b32.xlu0 %v628, 96
    %v635 = vpop.permute.xlu0 %634
    %v637 = vsel %vm116, %v635, 0.0
    %638 = vadd.xlane.f32.xlu0 %v637
    %v639 = vpop.xlane.xlu0 %638
    %v640 = vmul.f32 %v639, %v120
    %v641 = vsub.f32 %v628, %v640
    %v642 = vmul.f32 %v641, %v641
    %644 = vrot.lane.b32.xlu0 %v642, 96
    %v645 = vpop.permute.xlu0 %644
    %v647 = vsel %vm116, %v645, 0.0
    %648 = vadd.xlane.f32.xlu0 %v647
    %v649 = vpop.xlane.xlu0 %648
    %v650 = vmul.f32 %v649, %v127
    %v651 = vrsqrt.pop %v650
    %v652 = vmul.f32 %v650, %v651
    %vm653 = vcmp.eq.f32.partialorder %v650, inf
    %v654 = vsel %vm653, %v650, %v652
    %vm655 = vcmp.eq.f32.partialorder %v650, 0.0
    %v656 = vand.u32 %v650, 2147483648
    %v657 = vsel %vm655, %v656, %v654
    %v658 = vadd.f32 %v657, 1e-05
    %v659 = vrcp.pop %v658
    %v660 = vmul.f32 %v641, %v659
    %v662 = vlaneseq
    %v663 = vshrl.u32 %v662, 7
    %v664 = vsub.s32 0, %v663
    %v665 = vrot.slane %v630, %v664
    %666 = vrot.lane.b32.xlu0 %v665, 32
    %v667 = vpop.permute.xlu0 %666
    %v669 = vmul.f32 %v660, %v667
    %v671 = vlaneseq
    %v672 = vshrl.u32 %v671, 7
    %v673 = vsub.s32 0, %v672
    %v674 = vrot.slane %v632, %v673
    %675 = vrot.lane.b32.xlu0 %v674, 32
    %v676 = vpop.permute.xlu0 %675
    %v678 = vadd.f32 %v669, %v676
    %v679 = vtanh.pop %v678
    %681 = vrot.lane.b32.xlu0 %v679, 32
    %v682 = vpop.permute.xlu0 %681
    %v684 = vmul.f32 %v613, %v682
    %685 = vrot.lane.b32.xlu0 %v628, 64
    %v686 = vpop.permute.xlu0 %685
    %v688 = vsel %vm116, %v419, %v362
    %v689 = vsel %vm182, %v688, %v684
    %vm690 = vcmask 785408
    %v691 = vsel %vm690, %v689, %v686
    %692 = vst [vmem:[%s18] sm:$0xff] %v691
    %v693 = vld [vmem:[%s14] sm:$0x1]
    %v695 = vlaneseq
    %v696 = vshrl.u32 %v695, 7
    %v697 = vsub.s32 0, %v696
    %v698 = vrot.slane %v693, %v697
    %699 = vrot.lane.b32.xlu0 %v698, 64
    %v700 = vpop.permute.xlu0 %699
    %v702 = vmul.f32 %v684, %v700
    %704 = vrot.lane.b32.xlu0 %v702, 64
    %v705 = vpop.permute.xlu0 %704
    %v707 = vsel %vm116, %v705, 0.0
    %708 = vadd.xlane.f32.xlu0 %v707
    %v709 = vpop.xlane.xlu0 %708
    %v710 = vld [vmem:[#allocation2] sm:$0x1]
    %v712 = vlaneseq
    %v713 = vshrl.u32 %v712, 7
    %v714 = vsub.s32 0, %v713
    %v715 = vrot.slane %v710, %v714
    %v717 = vadd.f32 %v709, %v715
    %vm718 = vcmask 7168
    %719 = vst.msk [vmem:[%s17] sm:$0xff] %vm718, %v717
    // Predicated region
    $region74: #{tpu_custom_call.1} parent=1 // pred_check
      _
    $region75: #{tpu_custom_call.1} parent=1 // pred_check_branch
      %721 = sbr.rel (0) target = $region77
    $region76: #{tpu_custom_call.1} parent=1 // pred_region
      _
    $region77: #{tpu_custom_call.1} parent=1 // pred_fallthru
      _
    // Predicated region
    $region78: #{tpu_custom_call.1} parent=1 // pred_check
      _
    $region79: #{tpu_custom_call.1} parent=1 // pred_check_branch
      %723 = sbr.rel (0) target = $region81
    $region80: #{tpu_custom_call.1} parent=1 // pred_region
      _
    $region81: #{tpu_custom_call.1} parent=1 // pred_fallthru
      _
    // Predicated region
    $region82: #{tpu_custom_call.1} parent=1 // pred_check
      _
    $region83: #{tpu_custom_call.1} parent=1 // pred_check_branch
      %725 = sbr.rel (0) target = $region85
    $region84: #{tpu_custom_call.1} parent=1 // pred_region
      _
    $region85: #{tpu_custom_call.1} parent=1 // pred_fallthru
      _
    // Predicated region
    $region86: #{tpu_custom_call.1} parent=1 // pred_check
      _
    $region87: #{tpu_custom_call.1} parent=1 // pred_check_branch
      %727 = sbr.rel (0) target = $region89
    $region88: #{tpu_custom_call.1} parent=1 // pred_region
      _
    $region89: #{tpu_custom_call.1} parent=1 // pred_fallthru
      _
    %728 = vsyncpa [#allocation4], 1

</llo_original>
